<compile_context>
chip_gen: v6e
topology: v6e:2x2x1
jax: 0.10.0
libtpu: 0.0.40
codegen_flags: <defaults>
</compile_context>

<pallas_src>
import jax
import jax.numpy as jnp
from jax.experimental import pallas as pl
from jax.experimental.pallas import tpu as pltpu

EPS = 1e-5               # PyTorch nn.LayerNorm default eps

# ----------------------------- configuration -----------------------------
BATCH = 2
HIDDEN = 128             # stands in for bert/vit hidden_size (768 in the real model)
MLP_HIDDEN = 4           # args.mlp_hidden_sz -> adapter bottleneck = HIDDEN // MLP_HIDDEN
MID = HIDDEN // MLP_HIDDEN
PROMPT_LEN = 8           # args.prompt_length
CLASS_NUM = 8            # args.class_num
CPAD = 128               # cls-head output padded to a full lane group
SEG = ((2 * MID + 127) // 128) * 128   # 128-lane-aligned segment width for w1 slabs

assert CLASS_NUM <= CPAD, "cls-head padding too small"
assert CPAD <= HIDDEN, "cls bias packing assumes CPAD <= HIDDEN"

# fused adapter groups (pairs sharing one MXU push):
#   group 0: text_gate.fc1  & image_gate.fc1   (distinct inputs -> block-diag w1)
#   group 1: text_gate.fc2  & image_gate.fc2   (shared mm input -> concat w1)
#   group 2: mm_gate.fc1    & mm_gate.fc2      (distinct inputs -> block-diag w1)
#   group 3: t2v_trans[0]   & v2t_trans[0]     (shared mm_out input -> concat w1)
#
# vec2 slab layout (rows, width 2H, f32):
#   rows 0..7   : per group k: row 2k = [b1' | 0], row 2k+1 = [b2_A | b2_B]
#   rows 8..13  : per gate g:  row 8+2g = [W1 | W2], row 9+2g = [ln_g | ln_b]
#   row 14      : [B1_text (bcast H) | B1_image (bcast H)]
#   row 15      : [B1_mm   (bcast H) | cls_b (CPAD, zero-padded to H)]
ROW_GATE = 8
ROW_B1 = 14
ROW_CLSB = 15
VEC_ROWS = 16


# ------------------------------ fused kernel ------------------------------
def pmpl_fused_kernel(txt_ref, img_ref, mm_ref, vec_ref, wa_ref, w1bd_ref, w2bd_ref,
                      tv_ref, lf_ref):
    B, H = txt_ref.shape
    L = mm_ref.shape[0]
    H2 = 2 * H
    M2 = 2 * MID

    def ln(x):
        # parameter-free two-pass LayerNorm over lanes (gain/bias folded into w1/b1)
        mu = jnp.mean(x, axis=-1, keepdims=True)
        xc = x - mu
        var = jnp.mean(xc * xc, axis=-1, keepdims=True)
        return xc * jax.lax.rsqrt(var + EPS)

    def ln_affine(x, g, b):
        mu = jnp.mean(x, axis=-1, keepdims=True)
        xc = x - mu
        var = jnp.mean(xc * xc, axis=-1, keepdims=True)
        return xc * jax.lax.rsqrt(var + EPS) * g + b

    def fused_mlp(x_norm, w1, k):
        # two adapters fused: (M,K)@(K,2*MID) -> relu -> block-diag (2*MID,2H)
        b1 = vec_ref[2 * k:2 * k + 1, 0:M2]                     # (1, 2*MID)
        b2 = vec_ref[2 * k + 1:2 * k + 2, 0:H2]                 # (1, 2H)
        h = jnp.dot(x_norm.astype(jnp.bfloat16), w1,
                    preferred_element_type=jnp.float32) + b1
        h = jnp.maximum(h, 0.0)
        # TODO(synk): nn.Dropout(0.5) is identity at inference; training dropout omitted.
        w2 = w2bd_ref[:, k * H2:(k + 1) * H2]                   # (2*MID, 2H) block-diag
        return jnp.dot(h.astype(jnp.bfloat16), w2,
                       preferred_element_type=jnp.float32) + b2

    def gate_mix(y1, y2, g):
        # Gate.forward tail with dis=None (no dis multiply), y1/y2 already through fc1/fc2
        W1 = vec_ref[ROW_GATE + 2 * g:ROW_GATE + 2 * g + 1, 0:H]
        W2 = vec_ref[ROW_GATE + 2 * g:ROW_GATE + 2 * g + 1, H:H2]
        b1row = vec_ref[ROW_B1 + g // 2:ROW_B1 + g // 2 + 1, (g % 2) * H:(g % 2) * H + H]
        a = (jnp.sum(y1 * W1, axis=-1, keepdims=True)
             + jnp.sum(y2 * W2, axis=-1, keepdims=True))
        alpha = jnp.clip(jax.nn.sigmoid(a + b1row), 0.15, 0.85)
        g_g = vec_ref[ROW_GATE + 2 * g + 1:ROW_GATE + 2 * g + 2, 0:H]
        g_b = vec_ref[ROW_GATE + 2 * g + 1:ROW_GATE + 2 * g + 2, H:H2]
        return ln_affine(y1 * alpha + (1.0 - alpha) * y2, g_g, g_b)

    # ---- stage 1: normalize the three distinct adapter inputs once ----
    txt_norm = ln(txt_ref[...])                                 # (B, H)
    img_norm = ln(img_ref[...])                                 # (B, H)
    mm_norm = ln(mm_ref[...])                                   # (L, H)

    # ---- stage 2: group 0 (text/image fc1) on the deduped (B, 2H) CLS rows ----
    x0 = jnp.concatenate([txt_norm, img_norm], axis=-1)         # (B, 2H)
    y0 = fused_mlp(x0, w1bd_ref[:, 0:M2], 0)                    # (B, 2H) = [y_t1 | y_i1]

    # ---- stage 3: group 1 (text/image fc2) on the shared (L, H) mm rows ----
    y1g = fused_mlp(mm_norm, wa_ref[:, 0:M2], 1)                # (L, 2H) = [y_t2 | y_i2]

    # broadcast the batch-invariant / prompt-invariant results up to N = B*L rows
    y0_b = jnp.concatenate(
        [jnp.broadcast_to(y0[b:b + 1, :], (L, H2)) for b in range(B)], axis=0)  # (N, 2H)
    y1_b = jnp.concatenate([y1g] * B, axis=0)                                   # (N, 2H)

    # triGate.forward (two_gate=False, mm_memory provided); the PyTorch code calls
    # image_gate twice with identical args -> single evaluation is equivalent.
    text_memory = gate_mix(y0_b[:, 0:H], y1_b[:, 0:H], 0)       # (N, H)
    image_memory = gate_mix(y0_b[:, H:H2], y1_b[:, H:H2], 1)    # (N, H)

    # ---- stage 4: mm_gate, block-diag over [LN(text_memory) | LN(image_memory)] ----
    x2 = jnp.concatenate([ln(text_memory), ln(image_memory)], axis=-1)   # (N, 2H)
    y2g = fused_mlp(x2, w1bd_ref[:, SEG:SEG + M2], 2)                    # (N, 2H)
    mm_out = gate_mix(y2g[:, 0:H], y2g[:, H:H2], 2)                      # (N, H)

    # ---- stage 5: t2v / v2t adapters (shared mm_out input) -> one (N, 2H) slab ----
    tv_ref[...] = fused_mlp(ln(mm_out), wa_ref[:, SEG:SEG + M2], 3)      # [t2v | v2t]

    # ---- stage 6: gate_fusion = mean over prompt positions, then cls_head ----
    gf = jnp.concatenate(
        [jnp.mean(mm_out[b * L:(b + 1) * L, :], axis=0, keepdims=True) for b in range(B)],
        axis=0)                                                          # (B, H)
    cls_w = wa_ref[:, 2 * SEG:2 * SEG + CPAD]                            # (H, CPAD) bf16
    cls_b = vec_ref[ROW_CLSB:ROW_CLSB + 1, H:H + CPAD]                   # (1, CPAD)
    logits = jnp.dot(gf.astype(jnp.bfloat16), cls_w,
                     preferred_element_type=jnp.float32) + cls_b         # (B, CPAD)
    lf_ref[...] = jnp.concatenate([logits, gf], axis=-1)                 # (B, CPAD + H)


# ------------------------------ wrapper -----------------------------------
def pmpl_forward(packed, txt_cls, img_cls):
    """Simplified PMPL inference path (Train=False, use_layer_gate=True), fused.

    TODO(synk): the pretrained BERT/ViT encoder stacks (and the per-layer prompt /
    attention-mask plumbing feeding them) have no Pallas equivalent without a
    checkpoint; txt_cls / img_cls stand in for txt_tokens[:,0,:] / img_tokens[:,0,:].
    """
    B, H = txt_cls.shape
    L = packed["mm_memory"].shape[0]
    N = B * L

    vmem = pl.BlockSpec(memory_space=pltpu.MemorySpace.VMEM)

    tv, lf = pl.pallas_call(
        pmpl_fused_kernel,
        out_shape=(
            jax.ShapeDtypeStruct((N, 2 * H), jnp.float32),       # [t2v | v2t]
            jax.ShapeDtypeStruct((B, CPAD + H), jnp.float32),    # [logits_pad | gate_fusion]
        ),
        in_specs=[vmem] * 7,
        out_specs=(vmem, vmem),
    )(txt_cls, img_cls, packed["mm_memory"], packed["vec2"],
      packed["wA"], packed["w1_bd"], packed["w2_bd"])

    return {
        "logits": lf[:, :CLASS_NUM],
        "features": lf[:, CPAD:],
        "t2v_intermediate": tv[:, :H].reshape(B, L, H),
        "v2t_intermediate": tv[:, H:].reshape(B, L, H),
    }


# --------------------------- parameter init --------------------------------
def init_mlp_adapter(key, in_dim, hidden_div, out_dim):
    mid = in_dim // hidden_div
    k1, k2 = jax.random.split(key)
    return dict(
        ln_g=jnp.ones((1, in_dim), jnp.float32),      # nn.LayerNorm default init
        ln_b=jnp.zeros((1, in_dim), jnp.float32),
        w1=jax.random.normal(k1, (in_dim, mid), jnp.float32) / jnp.sqrt(in_dim),
        b1=jnp.zeros((1, mid), jnp.float32),
        w2=jax.random.normal(k2, (mid, out_dim), jnp.float32) / jnp.sqrt(mid),
        b2=jnp.zeros((1, out_dim), jnp.float32),
    )


def init_gate(key, H, hidden_div):
    ks = jax.random.split(key, 5)
    return dict(
        fc1=init_mlp_adapter(ks[0], H, hidden_div, H),
        fc2=init_mlp_adapter(ks[1], H, hidden_div, H),
        # kaiming_normal_: std = sqrt(2 / fan_in)
        W1=jax.random.normal(ks[2], (1, H), jnp.float32) * jnp.sqrt(2.0 / H),
        W2=jax.random.normal(ks[3], (1, H), jnp.float32) * jnp.sqrt(2.0 / H),
        B1=jax.random.normal(ks[4], (1, 1), jnp.float32) * jnp.sqrt(2.0),
        ln_g=jnp.ones((1, H), jnp.float32),
        ln_b=jnp.zeros((1, H), jnp.float32),
    )


def init_trigate(key, H, hidden_div):
    k1, k2, k3 = jax.random.split(key, 3)
    return dict(text_gate=init_gate(k1, H, hidden_div),
                image_gate=init_gate(k2, H, hidden_div),
                mm_gate=init_gate(k3, H, hidden_div))


def init_pmpl(key):
    ks = jax.random.split(key, 6)
    return dict(
        gate0=init_trigate(ks[0], HIDDEN, MLP_HIDDEN),
        mm_memory=jax.random.normal(ks[1], (1, PROMPT_LEN, HIDDEN), jnp.float32) * 0.02,
        t2v_trans0=init_mlp_adapter(ks[2], HIDDEN, MLP_HIDDEN, HIDDEN),
        v2t_trans0=init_mlp_adapter(ks[3], HIDDEN, MLP_HIDDEN, HIDDEN),
        cls_head=dict(
            w=jax.random.normal(ks[4], (HIDDEN, CLASS_NUM), jnp.float32) / jnp.sqrt(HIDDEN),
            b=jnp.zeros((1, CLASS_NUM), jnp.float32),
        ),
    )


# --------------------------- parameter packing -----------------------------
def _pad_lanes(x, width):
    return jnp.pad(x, ((0, 0), (0, width - x.shape[1])))


def pack_pmpl_params(p):
    """Fold adapter LayerNorms into linear1 and pack everything into 3 bf16 weight
    slabs + 1 f32 vector slab (7 kernel operands total, incl. activations)."""
    H, M2, H2 = HIDDEN, 2 * MID, 2 * HIDDEN
    g0 = p["gate0"]
    gates = [g0["text_gate"], g0["image_gate"], g0["mm_gate"]]

    def fold(a):
        # LN(x)*g + b followed by Linear1  ==  LN(x) @ (diag(g)@w1) + (b@w1 + b1)
        w1f = a["ln_g"].reshape(H, 1) * a["w1"]                  # (H, MID)
        b1f = a["b1"] + a["ln_b"] @ a["w1"]                      # (1, MID)
        return w1f, b1f, a["w2"], a["b2"]

    groups = [
        (gates[0]["fc1"], gates[1]["fc1"], True),    # group 0: block-diag (distinct inputs)
        (gates[0]["fc2"], gates[1]["fc2"], False),   # group 1: concat (shared mm input)
        (gates[2]["fc1"], gates[2]["fc2"], True),    # group 2: block-diag
        (p["t2v_trans0"], p["v2t_trans0"], False),   # group 3: concat (shared mm_out input)
    ]

    w1_bd_cols, w1_pair_cols, w2_cols, b1_rows, b2_rows = [], [], [], [], []
    for (aA, aB, bd) in groups:
        w1A, b1A, w2A, b2A = fold(aA)
        w1B, b1B, w2B, b2B = fold(aB)
        if bd:
            blk = jnp.zeros((H2, M2), jnp.float32)
            blk = blk.at[:H, :MID].set(w1A).at[H:, MID:].set(w1B)
            w1_bd_cols.append(blk)
        else:
            w1_pair_cols.append(jnp.concatenate([w1A, w1B], axis=1))     # (H, 2*MID)
        w2blk = jnp.zeros((M2, H2), jnp.float32)
        w2blk = w2blk.at[:MID, :H].set(w2A).at[MID:, H:].set(w2B)
        w2_cols.append(w2blk)
        b1_rows.append(jnp.concatenate([b1A, b1B], axis=1))              # (1, 2*MID)
        b2_rows.append(jnp.concatenate([b2A, b2B], axis=1))              # (1, 2H)

    # ---- vec2 slab (VEC_ROWS, 2H) f32 ----
    rows = []
    for k in range(4):
        rows.append(_pad_lanes(b1_rows[k], H2))
        rows.append(b2_rows[k])
    for g in gates:
        rows.append(jnp.concatenate([g["W1"], g["W2"]], axis=1))
        rows.append(jnp.concatenate([g["ln_g"], g["ln_b"]], axis=1))
    rows.append(jnp.concatenate([jnp.full((1, H), gates[0]["B1"][0, 0], jnp.float32),
                                 jnp.full((1, H), gates[1]["B1"][0, 0], jnp.float32)],
                                axis=1))
    cls_b_pad = jnp.zeros((1, H), jnp.float32).at[0, :CLASS_NUM].set(p["cls_head"]["b"][0])
    rows.append(jnp.concatenate([jnp.full((1, H), gates[2]["B1"][0, 0], jnp.float32),
                                 cls_b_pad], axis=1))
    vec2 = jnp.concatenate(rows, axis=0)
    assert vec2.shape == (VEC_ROWS, H2)

    # ---- weight slabs (bf16, 128-lane-aligned segments) ----
    cls_w_pad = jnp.zeros((H, CPAD), jnp.float32).at[:, :CLASS_NUM].set(p["cls_head"]["w"])
    wA = jnp.concatenate([_pad_lanes(w1_pair_cols[0], SEG),
                          _pad_lanes(w1_pair_cols[1], SEG),
                          cls_w_pad], axis=1).astype(jnp.bfloat16)       # (H, 2*SEG+CPAD)
    w1_bd = jnp.concatenate([_pad_lanes(w1_bd_cols[0], SEG),
                             _pad_lanes(w1_bd_cols[1], SEG)],
                            axis=1).astype(jnp.bfloat16)                 # (2H, 2*SEG)
    w2_bd = jnp.concatenate(w2_cols, axis=1).astype(jnp.bfloat16)        # (2*MID, 8H)

    return dict(mm_memory=p["mm_memory"][0],      # (L, H)
                vec2=vec2, wA=wA, w1_bd=w1_bd, w2_bd=w2_bd)


# --------------------------- pure-JAX reference -----------------------------
def _ln_ref(x, g, b):
    mu = jnp.mean(x, axis=-1, keepdims=True)
    xc = x - mu
    var = jnp.mean(xc * xc, axis=-1, keepdims=True)
    return xc * jax.lax.rsqrt(var + EPS) * g + b


def _adapter_ref(p, x):
    h = _ln_ref(x, p["ln_g"], p["ln_b"])
    h = jnp.dot(h.astype(jnp.bfloat16), p["w1"].astype(jnp.bfloat16),
                preferred_element_type=jnp.float32) + p["b1"]
    h = jnp.maximum(h, 0.0)
    return jnp.dot(h.astype(jnp.bfloat16), p["w2"].astype(jnp.bfloat16),
                   preferred_element_type=jnp.float32) + p["b2"]


def _gate_ref(p, x1, x2):
    y1 = _adapter_ref(p["fc1"], x1)
    y2 = _adapter_ref(p["fc2"], x2)
    a = (jnp.sum(y1 * p["W1"], -1, keepdims=True)
         + jnp.sum(y2 * p["W2"], -1, keepdims=True) + p["B1"][0, 0])
    alpha = jnp.clip(jax.nn.sigmoid(a), 0.15, 0.85)
    return _ln_ref(y1 * alpha + (1.0 - alpha) * y2, p["ln_g"], p["ln_b"])


def pmpl_reference(params, txt_cls, img_cls):
    B, H = txt_cls.shape
    L = PROMPT_LEN
    tf = jnp.repeat(txt_cls[:, None, :], L, axis=1).reshape(B * L, H)
    imf = jnp.repeat(img_cls[:, None, :], L, axis=1).reshape(B * L, H)
    mm = jnp.broadcast_to(params["mm_memory"], (B, L, H)).reshape(B * L, H)
    g0 = params["gate0"]
    tm = _gate_ref(g0["text_gate"], tf, mm)
    im = _gate_ref(g0["image_gate"], imf, mm)
    mm_out = _gate_ref(g0["mm_gate"], tm, im)
    t2v = _adapter_ref(params["t2v_trans0"], mm_out)
    v2t = _adapter_ref(params["v2t_trans0"], mm_out)
    gf = jnp.mean(mm_out.reshape(B, L, H), axis=1)
    logits = jnp.dot(gf.astype(jnp.bfloat16),
                     params["cls_head"]["w"].astype(jnp.bfloat16),
                     preferred_element_type=jnp.float32) + params["cls_head"]["b"]
    return {"logits": logits, "features": gf,
            "t2v_intermediate": t2v.reshape(B, L, H),
            "v2t_intermediate": v2t.reshape(B, L, H)}


# --------------------------------- main -------------------------------------
if __name__ == "__main__":
    key = jax.random.PRNGKey(0)
    kp, kt, ki = jax.random.split(key, 3)
    params = init_pmpl(kp)
    packed = pack_pmpl_params(params)

    # stand-ins for the frozen-encoder CLS features
    txt_cls = jax.random.normal(kt, (BATCH, HIDDEN), jnp.float32)
    img_cls = jax.random.normal(ki, (BATCH, HIDDEN), jnp.float32)

    out = jax.jit(pmpl_forward)(packed, txt_cls, img_cls)
    out = jax.block_until_ready(out)
    ref = jax.jit(pmpl_reference)(params, txt_cls, img_cls)
    ref = jax.block_until_ready(ref)

    assert out["logits"].shape == (BATCH, CLASS_NUM)
    assert out["features"].shape == (BATCH, HIDDEN)
    assert out["t2v_intermediate"].shape == (BATCH, PROMPT_LEN, HIDDEN)
    assert out["v2t_intermediate"].shape == (BATCH, PROMPT_LEN, HIDDEN)
    assert bool(jnp.all(jnp.isfinite(out["logits"])))
    for k in ("logits", "features", "t2v_intermediate", "v2t_intermediate"):
        assert bool(jnp.allclose(out[k], ref[k], atol=2e-2, rtol=2e-2)), k
    print("KERNEL_OK")
</pallas_src>

<mosaic_0001>
module attributes {stable_mosaic.version = 11 : i64} {
  func.func @pmpl_fused_kernel(%arg0: memref<2x128xf32, #tpu.memory_space<vmem>>, %arg1: memref<2x128xf32, #tpu.memory_space<vmem>>, %arg2: memref<8x128xf32, #tpu.memory_space<vmem>>, %arg3: memref<16x256xf32, #tpu.memory_space<vmem>>, %arg4: memref<128x384xbf16, #tpu.memory_space<vmem>>, %arg5: memref<256x256xbf16, #tpu.memory_space<vmem>>, %arg6: memref<64x1024xbf16, #tpu.memory_space<vmem>>, %arg7: memref<16x256xf32, #tpu.memory_space<vmem>>, %arg8: memref<2x256xf32, #tpu.memory_space<vmem>>) attributes {dimension_semantics = [], scalar_prefetch = 0 : i64, scratch_operands = 0 : i64, tpu.core_type = #tpu.core_type<tc>} {
    %c0 = arith.constant 0 : index
    %c0_0 = arith.constant 0 : index
    %0 = vector.load %arg0[%c0, %c0_0] : memref<2x128xf32, #tpu.memory_space<vmem>>, vector<2x128xf32>
    %cst = arith.constant dense<0.000000e+00> : vector<2xf32>
    %1 = vector.multi_reduction <add>, %0, %cst [1] : vector<2x128xf32> to vector<2xf32>
    %2 = vector.shape_cast %1 : vector<2xf32> to vector<2x1xf32>
    %cst_1 = arith.constant 1.280000e+02 : f32
    %3 = vector.broadcast %cst_1 : f32 to vector<2x1xf32>
    %4 = arith.divf %2, %3 : vector<2x1xf32>
    %5 = vector.broadcast %4 : vector<2x1xf32> to vector<2x128xf32>
    %6 = arith.subf %0, %5 : vector<2x128xf32>
    %7 = arith.mulf %6, %6 : vector<2x128xf32>
    %cst_2 = arith.constant dense<0.000000e+00> : vector<2xf32>
    %8 = vector.multi_reduction <add>, %7, %cst_2 [1] : vector<2x128xf32> to vector<2xf32>
    %9 = vector.shape_cast %8 : vector<2xf32> to vector<2x1xf32>
    %cst_3 = arith.constant 1.280000e+02 : f32
    %10 = vector.broadcast %cst_3 : f32 to vector<2x1xf32>
    %11 = arith.divf %9, %10 : vector<2x1xf32>
    %cst_4 = arith.constant 9.99999974E-6 : f32
    %12 = vector.broadcast %cst_4 : f32 to vector<2x1xf32>
    %13 = arith.addf %11, %12 : vector<2x1xf32>
    %14 = math.rsqrt %13 : vector<2x1xf32>
    %15 = vector.broadcast %14 : vector<2x1xf32> to vector<2x128xf32>
    %16 = arith.mulf %6, %15 : vector<2x128xf32>
    %c0_5 = arith.constant 0 : index
    %c0_6 = arith.constant 0 : index
    %17 = vector.load %arg1[%c0_5, %c0_6] : memref<2x128xf32, #tpu.memory_space<vmem>>, vector<2x128xf32>
    %cst_7 = arith.constant dense<0.000000e+00> : vector<2xf32>
    %18 = vector.multi_reduction <add>, %17, %cst_7 [1] : vector<2x128xf32> to vector<2xf32>
    %19 = vector.shape_cast %18 : vector<2xf32> to vector<2x1xf32>
    %cst_8 = arith.constant 1.280000e+02 : f32
    %20 = vector.broadcast %cst_8 : f32 to vector<2x1xf32>
    %21 = arith.divf %19, %20 : vector<2x1xf32>
    %22 = vector.broadcast %21 : vector<2x1xf32> to vector<2x128xf32>
    %23 = arith.subf %17, %22 : vector<2x128xf32>
    %24 = arith.mulf %23, %23 : vector<2x128xf32>
    %cst_9 = arith.constant dense<0.000000e+00> : vector<2xf32>
    %25 = vector.multi_reduction <add>, %24, %cst_9 [1] : vector<2x128xf32> to vector<2xf32>
    %26 = vector.shape_cast %25 : vector<2xf32> to vector<2x1xf32>
    %cst_10 = arith.constant 1.280000e+02 : f32
    %27 = vector.broadcast %cst_10 : f32 to vector<2x1xf32>
    %28 = arith.divf %26, %27 : vector<2x1xf32>
    %cst_11 = arith.constant 9.99999974E-6 : f32
    %29 = vector.broadcast %cst_11 : f32 to vector<2x1xf32>
    %30 = arith.addf %28, %29 : vector<2x1xf32>
    %31 = math.rsqrt %30 : vector<2x1xf32>
    %32 = vector.broadcast %31 : vector<2x1xf32> to vector<2x128xf32>
    %33 = arith.mulf %23, %32 : vector<2x128xf32>
    %c0_12 = arith.constant 0 : index
    %c0_13 = arith.constant 0 : index
    %34 = vector.load %arg2[%c0_12, %c0_13] : memref<8x128xf32, #tpu.memory_space<vmem>>, vector<8x128xf32>
    %cst_14 = arith.constant dense<0.000000e+00> : vector<8xf32>
    %35 = vector.multi_reduction <add>, %34, %cst_14 [1] : vector<8x128xf32> to vector<8xf32>
    %36 = vector.shape_cast %35 : vector<8xf32> to vector<8x1xf32>
    %cst_15 = arith.constant 1.280000e+02 : f32
    %37 = vector.broadcast %cst_15 : f32 to vector<8x1xf32>
    %38 = arith.divf %36, %37 : vector<8x1xf32>
    %39 = vector.broadcast %38 : vector<8x1xf32> to vector<8x128xf32>
    %40 = arith.subf %34, %39 : vector<8x128xf32>
    %41 = arith.mulf %40, %40 : vector<8x128xf32>
    %cst_16 = arith.constant dense<0.000000e+00> : vector<8xf32>
    %42 = vector.multi_reduction <add>, %41, %cst_16 [1] : vector<8x128xf32> to vector<8xf32>
    %43 = vector.shape_cast %42 : vector<8xf32> to vector<8x1xf32>
    %cst_17 = arith.constant 1.280000e+02 : f32
    %44 = vector.broadcast %cst_17 : f32 to vector<8x1xf32>
    %45 = arith.divf %43, %44 : vector<8x1xf32>
    %cst_18 = arith.constant 9.99999974E-6 : f32
    %46 = vector.broadcast %cst_18 : f32 to vector<8x1xf32>
    %47 = arith.addf %45, %46 : vector<8x1xf32>
    %48 = math.rsqrt %47 : vector<8x1xf32>
    %49 = vector.broadcast %48 : vector<8x1xf32> to vector<8x128xf32>
    %50 = arith.mulf %40, %49 : vector<8x128xf32>
    %51 = tpu.concatenate %16, %33 in 1 : vector<2x128xf32>, vector<2x128xf32> -> vector<2x256xf32>
    %c0_19 = arith.constant 0 : index
    %c0_20 = arith.constant 0 : index
    %52 = vector.load %arg5[%c0_19, %c0_20] : memref<256x256xbf16, #tpu.memory_space<vmem>>, vector<256x64xbf16>
    %c0_21 = arith.constant 0 : index
    %c0_22 = arith.constant 0 : index
    %53 = vector.load %arg3[%c0_21, %c0_22] : memref<16x256xf32, #tpu.memory_space<vmem>>, vector<1x64xf32>
    %c1 = arith.constant 1 : index
    %c0_23 = arith.constant 0 : index
    %54 = vector.load %arg3[%c1, %c0_23] : memref<16x256xf32, #tpu.memory_space<vmem>>, vector<1x256xf32>
    %55 = arith.truncf %51 : vector<2x256xf32> to vector<2x256xbf16>
    %cst_24 = arith.constant dense<0.000000e+00> : vector<2x64xf32>
    %56 = tpu.matmul %55, %52, %cst_24 {dimension_numbers = #tpu.dot_dimension_numbers<[1], [0], [0], [1], [0, 0, 1, 1], [], []>} : vector<2x256xbf16>, vector<256x64xbf16>, vector<2x64xf32> -> vector<2x64xf32>
    %57 = vector.broadcast %53 : vector<1x64xf32> to vector<2x64xf32>
    %58 = arith.addf %56, %57 : vector<2x64xf32>
    %cst_25 = arith.constant 0.000000e+00 : f32
    %59 = vector.broadcast %cst_25 : f32 to vector<2x64xf32>
    %60 = arith.maximumf %58, %59 : vector<2x64xf32>
    %c0_26 = arith.constant 0 : index
    %c0_27 = arith.constant 0 : index
    %61 = vector.load %arg6[%c0_26, %c0_27] : memref<64x1024xbf16, #tpu.memory_space<vmem>>, vector<64x256xbf16>
    %62 = arith.truncf %60 : vector<2x64xf32> to vector<2x64xbf16>
    %cst_28 = arith.constant dense<0.000000e+00> : vector<2x256xf32>
    %63 = tpu.matmul %62, %61, %cst_28 {dimension_numbers = #tpu.dot_dimension_numbers<[1], [0], [0], [1], [0, 0, 1, 1], [], []>} : vector<2x64xbf16>, vector<64x256xbf16>, vector<2x256xf32> -> vector<2x256xf32>
    %64 = vector.broadcast %54 : vector<1x256xf32> to vector<2x256xf32>
    %65 = arith.addf %63, %64 : vector<2x256xf32>
    %c0_29 = arith.constant 0 : index
    %c0_30 = arith.constant 0 : index
    %66 = vector.load %arg4[%c0_29, %c0_30] : memref<128x384xbf16, #tpu.memory_space<vmem>>, vector<128x64xbf16>
    %c2 = arith.constant 2 : index
    %c0_31 = arith.constant 0 : index
    %67 = vector.load %arg3[%c2, %c0_31] : memref<16x256xf32, #tpu.memory_space<vmem>>, vector<1x64xf32>
    %c3 = arith.constant 3 : index
    %c0_32 = arith.constant 0 : index
    %68 = vector.load %arg3[%c3, %c0_32] : memref<16x256xf32, #tpu.memory_space<vmem>>, vector<1x256xf32>
    %69 = arith.truncf %50 : vector<8x128xf32> to vector<8x128xbf16>
    %cst_33 = arith.constant dense<0.000000e+00> : vector<8x64xf32>
    %70 = tpu.matmul %69, %66, %cst_33 {dimension_numbers = #tpu.dot_dimension_numbers<[1], [0], [0], [1], [0, 0, 1, 1], [], []>} : vector<8x128xbf16>, vector<128x64xbf16>, vector<8x64xf32> -> vector<8x64xf32>
    %71 = vector.broadcast %67 : vector<1x64xf32> to vector<8x64xf32>
    %72 = arith.addf %70, %71 : vector<8x64xf32>
    %cst_34 = arith.constant 0.000000e+00 : f32
    %73 = vector.broadcast %cst_34 : f32 to vector<8x64xf32>
    %74 = arith.maximumf %72, %73 : vector<8x64xf32>
    %c0_35 = arith.constant 0 : index
    %c256 = arith.constant 256 : index
    %75 = vector.load %arg6[%c0_35, %c256] : memref<64x1024xbf16, #tpu.memory_space<vmem>>, vector<64x256xbf16>
    %76 = arith.truncf %74 : vector<8x64xf32> to vector<8x64xbf16>
    %cst_36 = arith.constant dense<0.000000e+00> : vector<8x256xf32>
    %77 = tpu.matmul %76, %75, %cst_36 {dimension_numbers = #tpu.dot_dimension_numbers<[1], [0], [0], [1], [0, 0, 1, 1], [], []>} : vector<8x64xbf16>, vector<64x256xbf16>, vector<8x256xf32> -> vector<8x256xf32>
    %78 = vector.broadcast %68 : vector<1x256xf32> to vector<8x256xf32>
    %79 = arith.addf %77, %78 : vector<8x256xf32>
    %80 = vector.extract_strided_slice %65 {offsets = [0, 0], sizes = [1, 256], strides = [1, 1]} : vector<2x256xf32> to vector<1x256xf32>
    %81 = vector.shape_cast %80 : vector<1x256xf32> to vector<1x256xf32>
    %82 = vector.broadcast %81 : vector<1x256xf32> to vector<8x256xf32>
    %83 = vector.extract_strided_slice %65 {offsets = [1, 0], sizes = [1, 256], strides = [1, 1]} : vector<2x256xf32> to vector<1x256xf32>
    %84 = vector.shape_cast %83 : vector<1x256xf32> to vector<1x256xf32>
    %85 = vector.broadcast %84 : vector<1x256xf32> to vector<8x256xf32>
    %86 = tpu.concatenate %82, %85 in 0 : vector<8x256xf32>, vector<8x256xf32> -> vector<16x256xf32>
    %87 = tpu.concatenate %79, %79 in 0 : vector<8x256xf32>, vector<8x256xf32> -> vector<16x256xf32>
    %88 = vector.extract_strided_slice %86 {offsets = [0, 0], sizes = [16, 128], strides = [1, 1]} : vector<16x256xf32> to vector<16x128xf32>
    %89 = vector.extract_strided_slice %87 {offsets = [0, 0], sizes = [16, 128], strides = [1, 1]} : vector<16x256xf32> to vector<16x128xf32>
    %c8 = arith.constant 8 : index
    %c0_37 = arith.constant 0 : index
    %90 = vector.load %arg3[%c8, %c0_37] : memref<16x256xf32, #tpu.memory_space<vmem>>, vector<1x128xf32>
    %c8_38 = arith.constant 8 : index
    %c128 = arith.constant 128 : index
    %91 = vector.load %arg3[%c8_38, %c128] : memref<16x256xf32, #tpu.memory_space<vmem>>, vector<1x128xf32>
    %c14 = arith.constant 14 : index
    %c0_39 = arith.constant 0 : index
    %92 = vector.load %arg3[%c14, %c0_39] : memref<16x256xf32, #tpu.memory_space<vmem>>, vector<1x128xf32>
    %93 = vector.broadcast %90 : vector<1x128xf32> to vector<16x128xf32>
    %94 = arith.mulf %88, %93 : vector<16x128xf32>
    %cst_40 = arith.constant dense<0.000000e+00> : vector<16xf32>
    %95 = vector.multi_reduction <add>, %94, %cst_40 [1] : vector<16x128xf32> to vector<16xf32>
    %96 = vector.shape_cast %95 : vector<16xf32> to vector<16x1xf32>
    %97 = vector.broadcast %91 : vector<1x128xf32> to vector<16x128xf32>
    %98 = arith.mulf %89, %97 : vector<16x128xf32>
    %cst_41 = arith.constant dense<0.000000e+00> : vector<16xf32>
    %99 = vector.multi_reduction <add>, %98, %cst_41 [1] : vector<16x128xf32> to vector<16xf32>
    %100 = vector.shape_cast %99 : vector<16xf32> to vector<16x1xf32>
    %101 = arith.addf %96, %100 : vector<16x1xf32>
    %102 = vector.broadcast %101 : vector<16x1xf32> to vector<16x128xf32>
    %103 = vector.broadcast %92 : vector<1x128xf32> to vector<16x128xf32>
    %104 = arith.addf %102, %103 : vector<16x128xf32>
    %105 = arith.negf %104 : vector<16x128xf32>
    %106 = math.exp %105 : vector<16x128xf32>
    %cst_42 = arith.constant 1.000000e+00 : f32
    %107 = vector.broadcast %cst_42 : f32 to vector<16x128xf32>
    %108 = arith.addf %107, %106 : vector<16x128xf32>
    %109 = arith.divf %107, %108 : vector<16x128xf32>
    %cst_43 = arith.constant 1.500000e-01 : f32
    %cst_44 = arith.constant 8.500000e-01 : f32
    %110 = vector.broadcast %cst_43 : f32 to vector<16x128xf32>
    %111 = arith.maximumf %110, %109 : vector<16x128xf32>
    %112 = vector.broadcast %cst_44 : f32 to vector<16x128xf32>
    %113 = arith.minimumf %112, %111 : vector<16x128xf32>
    %c9 = arith.constant 9 : index
    %c0_45 = arith.constant 0 : index
    %114 = vector.load %arg3[%c9, %c0_45] : memref<16x256xf32, #tpu.memory_space<vmem>>, vector<1x128xf32>
    %c9_46 = arith.constant 9 : index
    %c128_47 = arith.constant 128 : index
    %115 = vector.load %arg3[%c9_46, %c128_47] : memref<16x256xf32, #tpu.memory_space<vmem>>, vector<1x128xf32>
    %116 = arith.mulf %88, %113 : vector<16x128xf32>
    %cst_48 = arith.constant 1.000000e+00 : f32
    %117 = vector.broadcast %cst_48 : f32 to vector<16x128xf32>
    %118 = arith.subf %117, %113 : vector<16x128xf32>
    %119 = arith.mulf %118, %89 : vector<16x128xf32>
    %120 = arith.addf %116, %119 : vector<16x128xf32>
    %cst_49 = arith.constant dense<0.000000e+00> : vector<16xf32>
    %121 = vector.multi_reduction <add>, %120, %cst_49 [1] : vector<16x128xf32> to vector<16xf32>
    %122 = vector.shape_cast %121 : vector<16xf32> to vector<16x1xf32>
    %cst_50 = arith.constant 1.280000e+02 : f32
    %123 = vector.broadcast %cst_50 : f32 to vector<16x1xf32>
    %124 = arith.divf %122, %123 : vector<16x1xf32>
    %125 = vector.broadcast %124 : vector<16x1xf32> to vector<16x128xf32>
    %126 = arith.subf %120, %125 : vector<16x128xf32>
    %127 = arith.mulf %126, %126 : vector<16x128xf32>
    %cst_51 = arith.constant dense<0.000000e+00> : vector<16xf32>
    %128 = vector.multi_reduction <add>, %127, %cst_51 [1] : vector<16x128xf32> to vector<16xf32>
    %129 = vector.shape_cast %128 : vector<16xf32> to vector<16x1xf32>
    %cst_52 = arith.constant 1.280000e+02 : f32
    %130 = vector.broadcast %cst_52 : f32 to vector<16x1xf32>
    %131 = arith.divf %129, %130 : vector<16x1xf32>
    %cst_53 = arith.constant 9.99999974E-6 : f32
    %132 = vector.broadcast %cst_53 : f32 to vector<16x1xf32>
    %133 = arith.addf %131, %132 : vector<16x1xf32>
    %134 = math.rsqrt %133 : vector<16x1xf32>
    %135 = vector.broadcast %134 : vector<16x1xf32> to vector<16x128xf32>
    %136 = arith.mulf %126, %135 : vector<16x128xf32>
    %137 = vector.broadcast %114 : vector<1x128xf32> to vector<16x128xf32>
    %138 = arith.mulf %136, %137 : vector<16x128xf32>
    %139 = vector.broadcast %115 : vector<1x128xf32> to vector<16x128xf32>
    %140 = arith.addf %138, %139 : vector<16x128xf32>
    %141 = vector.extract_strided_slice %86 {offsets = [0, 128], sizes = [16, 128], strides = [1, 1]} : vector<16x256xf32> to vector<16x128xf32>
    %142 = vector.extract_strided_slice %87 {offsets = [0, 128], sizes = [16, 128], strides = [1, 1]} : vector<16x256xf32> to vector<16x128xf32>
    %c10 = arith.constant 10 : index
    %c0_54 = arith.constant 0 : index
    %143 = vector.load %arg3[%c10, %c0_54] : memref<16x256xf32, #tpu.memory_space<vmem>>, vector<1x128xf32>
    %c10_55 = arith.constant 10 : index
    %c128_56 = arith.constant 128 : index
    %144 = vector.load %arg3[%c10_55, %c128_56] : memref<16x256xf32, #tpu.memory_space<vmem>>, vector<1x128xf32>
    %c14_57 = arith.constant 14 : index
    %c128_58 = arith.constant 128 : index
    %145 = vector.load %arg3[%c14_57, %c128_58] : memref<16x256xf32, #tpu.memory_space<vmem>>, vector<1x128xf32>
    %146 = vector.broadcast %143 : vector<1x128xf32> to vector<16x128xf32>
    %147 = arith.mulf %141, %146 : vector<16x128xf32>
    %cst_59 = arith.constant dense<0.000000e+00> : vector<16xf32>
    %148 = vector.multi_reduction <add>, %147, %cst_59 [1] : vector<16x128xf32> to vector<16xf32>
    %149 = vector.shape_cast %148 : vector<16xf32> to vector<16x1xf32>
    %150 = vector.broadcast %144 : vector<1x128xf32> to vector<16x128xf32>
    %151 = arith.mulf %142, %150 : vector<16x128xf32>
    %cst_60 = arith.constant dense<0.000000e+00> : vector<16xf32>
    %152 = vector.multi_reduction <add>, %151, %cst_60 [1] : vector<16x128xf32> to vector<16xf32>
    %153 = vector.shape_cast %152 : vector<16xf32> to vector<16x1xf32>
    %154 = arith.addf %149, %153 : vector<16x1xf32>
    %155 = vector.broadcast %154 : vector<16x1xf32> to vector<16x128xf32>
    %156 = vector.broadcast %145 : vector<1x128xf32> to vector<16x128xf32>
    %157 = arith.addf %155, %156 : vector<16x128xf32>
    %158 = arith.negf %157 : vector<16x128xf32>
    %159 = math.exp %158 : vector<16x128xf32>
    %cst_61 = arith.constant 1.000000e+00 : f32
    %160 = vector.broadcast %cst_61 : f32 to vector<16x128xf32>
    %161 = arith.addf %160, %159 : vector<16x128xf32>
    %162 = arith.divf %160, %161 : vector<16x128xf32>
    %cst_62 = arith.constant 1.500000e-01 : f32
    %cst_63 = arith.constant 8.500000e-01 : f32
    %163 = vector.broadcast %cst_62 : f32 to vector<16x128xf32>
    %164 = arith.maximumf %163, %162 : vector<16x128xf32>
    %165 = vector.broadcast %cst_63 : f32 to vector<16x128xf32>
    %166 = arith.minimumf %165, %164 : vector<16x128xf32>
    %c11 = arith.constant 11 : index
    %c0_64 = arith.constant 0 : index
    %167 = vector.load %arg3[%c11, %c0_64] : memref<16x256xf32, #tpu.memory_space<vmem>>, vector<1x128xf32>
    %c11_65 = arith.constant 11 : index
    %c128_66 = arith.constant 128 : index
    %168 = vector.load %arg3[%c11_65, %c128_66] : memref<16x256xf32, #tpu.memory_space<vmem>>, vector<1x128xf32>
    %169 = arith.mulf %141, %166 : vector<16x128xf32>
    %cst_67 = arith.constant 1.000000e+00 : f32
    %170 = vector.broadcast %cst_67 : f32 to vector<16x128xf32>
    %171 = arith.subf %170, %166 : vector<16x128xf32>
    %172 = arith.mulf %171, %142 : vector<16x128xf32>
    %173 = arith.addf %169, %172 : vector<16x128xf32>
    %cst_68 = arith.constant dense<0.000000e+00> : vector<16xf32>
    %174 = vector.multi_reduction <add>, %173, %cst_68 [1] : vector<16x128xf32> to vector<16xf32>
    %175 = vector.shape_cast %174 : vector<16xf32> to vector<16x1xf32>
    %cst_69 = arith.constant 1.280000e+02 : f32
    %176 = vector.broadcast %cst_69 : f32 to vector<16x1xf32>
    %177 = arith.divf %175, %176 : vector<16x1xf32>
    %178 = vector.broadcast %177 : vector<16x1xf32> to vector<16x128xf32>
    %179 = arith.subf %173, %178 : vector<16x128xf32>
    %180 = arith.mulf %179, %179 : vector<16x128xf32>
    %cst_70 = arith.constant dense<0.000000e+00> : vector<16xf32>
    %181 = vector.multi_reduction <add>, %180, %cst_70 [1] : vector<16x128xf32> to vector<16xf32>
    %182 = vector.shape_cast %181 : vector<16xf32> to vector<16x1xf32>
    %cst_71 = arith.constant 1.280000e+02 : f32
    %183 = vector.broadcast %cst_71 : f32 to vector<16x1xf32>
    %184 = arith.divf %182, %183 : vector<16x1xf32>
    %cst_72 = arith.constant 9.99999974E-6 : f32
    %185 = vector.broadcast %cst_72 : f32 to vector<16x1xf32>
    %186 = arith.addf %184, %185 : vector<16x1xf32>
    %187 = math.rsqrt %186 : vector<16x1xf32>
    %188 = vector.broadcast %187 : vector<16x1xf32> to vector<16x128xf32>
    %189 = arith.mulf %179, %188 : vector<16x128xf32>
    %190 = vector.broadcast %167 : vector<1x128xf32> to vector<16x128xf32>
    %191 = arith.mulf %189, %190 : vector<16x128xf32>
    %192 = vector.broadcast %168 : vector<1x128xf32> to vector<16x128xf32>
    %193 = arith.addf %191, %192 : vector<16x128xf32>
    %cst_73 = arith.constant dense<0.000000e+00> : vector<16xf32>
    %194 = vector.multi_reduction <add>, %140, %cst_73 [1] : vector<16x128xf32> to vector<16xf32>
    %195 = vector.shape_cast %194 : vector<16xf32> to vector<16x1xf32>
    %cst_74 = arith.constant 1.280000e+02 : f32
    %196 = vector.broadcast %cst_74 : f32 to vector<16x1xf32>
    %197 = arith.divf %195, %196 : vector<16x1xf32>
    %198 = vector.broadcast %197 : vector<16x1xf32> to vector<16x128xf32>
    %199 = arith.subf %140, %198 : vector<16x128xf32>
    %200 = arith.mulf %199, %199 : vector<16x128xf32>
    %cst_75 = arith.constant dense<0.000000e+00> : vector<16xf32>
    %201 = vector.multi_reduction <add>, %200, %cst_75 [1] : vector<16x128xf32> to vector<16xf32>
    %202 = vector.shape_cast %201 : vector<16xf32> to vector<16x1xf32>
    %cst_76 = arith.constant 1.280000e+02 : f32
    %203 = vector.broadcast %cst_76 : f32 to vector<16x1xf32>
    %204 = arith.divf %202, %203 : vector<16x1xf32>
    %cst_77 = arith.constant 9.99999974E-6 : f32
    %205 = vector.broadcast %cst_77 : f32 to vector<16x1xf32>
    %206 = arith.addf %204, %205 : vector<16x1xf32>
    %207 = math.rsqrt %206 : vector<16x1xf32>
    %208 = vector.broadcast %207 : vector<16x1xf32> to vector<16x128xf32>
    %209 = arith.mulf %199, %208 : vector<16x128xf32>
    %cst_78 = arith.constant dense<0.000000e+00> : vector<16xf32>
    %210 = vector.multi_reduction <add>, %193, %cst_78 [1] : vector<16x128xf32> to vector<16xf32>
    %211 = vector.shape_cast %210 : vector<16xf32> to vector<16x1xf32>
    %cst_79 = arith.constant 1.280000e+02 : f32
    %212 = vector.broadcast %cst_79 : f32 to vector<16x1xf32>
    %213 = arith.divf %211, %212 : vector<16x1xf32>
    %214 = vector.broadcast %213 : vector<16x1xf32> to vector<16x128xf32>
    %215 = arith.subf %193, %214 : vector<16x128xf32>
    %216 = arith.mulf %215, %215 : vector<16x128xf32>
    %cst_80 = arith.constant dense<0.000000e+00> : vector<16xf32>
    %217 = vector.multi_reduction <add>, %216, %cst_80 [1] : vector<16x128xf32> to vector<16xf32>
    %218 = vector.shape_cast %217 : vector<16xf32> to vector<16x1xf32>
    %cst_81 = arith.constant 1.280000e+02 : f32
    %219 = vector.broadcast %cst_81 : f32 to vector<16x1xf32>
    %220 = arith.divf %218, %219 : vector<16x1xf32>
    %cst_82 = arith.constant 9.99999974E-6 : f32
    %221 = vector.broadcast %cst_82 : f32 to vector<16x1xf32>
    %222 = arith.addf %220, %221 : vector<16x1xf32>
    %223 = math.rsqrt %222 : vector<16x1xf32>
    %224 = vector.broadcast %223 : vector<16x1xf32> to vector<16x128xf32>
    %225 = arith.mulf %215, %224 : vector<16x128xf32>
    %226 = tpu.concatenate %209, %225 in 1 : vector<16x128xf32>, vector<16x128xf32> -> vector<16x256xf32>
    %c0_83 = arith.constant 0 : index
    %c128_84 = arith.constant 128 : index
    %227 = vector.load %arg5[%c0_83, %c128_84] : memref<256x256xbf16, #tpu.memory_space<vmem>>, vector<256x64xbf16>
    %c4 = arith.constant 4 : index
    %c0_85 = arith.constant 0 : index
    %228 = vector.load %arg3[%c4, %c0_85] : memref<16x256xf32, #tpu.memory_space<vmem>>, vector<1x64xf32>
    %c5 = arith.constant 5 : index
    %c0_86 = arith.constant 0 : index
    %229 = vector.load %arg3[%c5, %c0_86] : memref<16x256xf32, #tpu.memory_space<vmem>>, vector<1x256xf32>
    %230 = arith.truncf %226 : vector<16x256xf32> to vector<16x256xbf16>
    %cst_87 = arith.constant dense<0.000000e+00> : vector<16x64xf32>
    %231 = tpu.matmul %230, %227, %cst_87 {dimension_numbers = #tpu.dot_dimension_numbers<[1], [0], [0], [1], [0, 0, 1, 1], [], []>} : vector<16x256xbf16>, vector<256x64xbf16>, vector<16x64xf32> -> vector<16x64xf32>
    %232 = vector.broadcast %228 : vector<1x64xf32> to vector<16x64xf32>
    %233 = arith.addf %231, %232 : vector<16x64xf32>
    %cst_88 = arith.constant 0.000000e+00 : f32
    %234 = vector.broadcast %cst_88 : f32 to vector<16x64xf32>
    %235 = arith.maximumf %233, %234 : vector<16x64xf32>
    %c0_89 = arith.constant 0 : index
    %c512 = arith.constant 512 : index
    %236 = vector.load %arg6[%c0_89, %c512] : memref<64x1024xbf16, #tpu.memory_space<vmem>>, vector<64x256xbf16>
    %237 = arith.truncf %235 : vector<16x64xf32> to vector<16x64xbf16>
    %cst_90 = arith.constant dense<0.000000e+00> : vector<16x256xf32>
    %238 = tpu.matmul %237, %236, %cst_90 {dimension_numbers = #tpu.dot_dimension_numbers<[1], [0], [0], [1], [0, 0, 1, 1], [], []>} : vector<16x64xbf16>, vector<64x256xbf16>, vector<16x256xf32> -> vector<16x256xf32>
    %239 = vector.broadcast %229 : vector<1x256xf32> to vector<16x256xf32>
    %240 = arith.addf %238, %239 : vector<16x256xf32>
    %241 = vector.extract_strided_slice %240 {offsets = [0, 0], sizes = [16, 128], strides = [1, 1]} : vector<16x256xf32> to vector<16x128xf32>
    %242 = vector.extract_strided_slice %240 {offsets = [0, 128], sizes = [16, 128], strides = [1, 1]} : vector<16x256xf32> to vector<16x128xf32>
    %c12 = arith.constant 12 : index
    %c0_91 = arith.constant 0 : index
    %243 = vector.load %arg3[%c12, %c0_91] : memref<16x256xf32, #tpu.memory_space<vmem>>, vector<1x128xf32>
    %c12_92 = arith.constant 12 : index
    %c128_93 = arith.constant 128 : index
    %244 = vector.load %arg3[%c12_92, %c128_93] : memref<16x256xf32, #tpu.memory_space<vmem>>, vector<1x128xf32>
    %c15 = arith.constant 15 : index
    %c0_94 = arith.constant 0 : index
    %245 = vector.load %arg3[%c15, %c0_94] : memref<16x256xf32, #tpu.memory_space<vmem>>, vector<1x128xf32>
    %246 = vector.broadcast %243 : vector<1x128xf32> to vector<16x128xf32>
    %247 = arith.mulf %241, %246 : vector<16x128xf32>
    %cst_95 = arith.constant dense<0.000000e+00> : vector<16xf32>
    %248 = vector.multi_reduction <add>, %247, %cst_95 [1] : vector<16x128xf32> to vector<16xf32>
    %249 = vector.shape_cast %248 : vector<16xf32> to vector<16x1xf32>
    %250 = vector.broadcast %244 : vector<1x128xf32> to vector<16x128xf32>
    %251 = arith.mulf %242, %250 : vector<16x128xf32>
    %cst_96 = arith.constant dense<0.000000e+00> : vector<16xf32>
    %252 = vector.multi_reduction <add>, %251, %cst_96 [1] : vector<16x128xf32> to vector<16xf32>
    %253 = vector.shape_cast %252 : vector<16xf32> to vector<16x1xf32>
    %254 = arith.addf %249, %253 : vector<16x1xf32>
    %255 = vector.broadcast %254 : vector<16x1xf32> to vector<16x128xf32>
    %256 = vector.broadcast %245 : vector<1x128xf32> to vector<16x128xf32>
    %257 = arith.addf %255, %256 : vector<16x128xf32>
    %258 = arith.negf %257 : vector<16x128xf32>
    %259 = math.exp %258 : vector<16x128xf32>
    %cst_97 = arith.constant 1.000000e+00 : f32
    %260 = vector.broadcast %cst_97 : f32 to vector<16x128xf32>
    %261 = arith.addf %260, %259 : vector<16x128xf32>
    %262 = arith.divf %260, %261 : vector<16x128xf32>
    %cst_98 = arith.constant 1.500000e-01 : f32
    %cst_99 = arith.constant 8.500000e-01 : f32
    %263 = vector.broadcast %cst_98 : f32 to vector<16x128xf32>
    %264 = arith.maximumf %263, %262 : vector<16x128xf32>
    %265 = vector.broadcast %cst_99 : f32 to vector<16x128xf32>
    %266 = arith.minimumf %265, %264 : vector<16x128xf32>
    %c13 = arith.constant 13 : index
    %c0_100 = arith.constant 0 : index
    %267 = vector.load %arg3[%c13, %c0_100] : memref<16x256xf32, #tpu.memory_space<vmem>>, vector<1x128xf32>
    %c13_101 = arith.constant 13 : index
    %c128_102 = arith.constant 128 : index
    %268 = vector.load %arg3[%c13_101, %c128_102] : memref<16x256xf32, #tpu.memory_space<vmem>>, vector<1x128xf32>
    %269 = arith.mulf %241, %266 : vector<16x128xf32>
    %cst_103 = arith.constant 1.000000e+00 : f32
    %270 = vector.broadcast %cst_103 : f32 to vector<16x128xf32>
    %271 = arith.subf %270, %266 : vector<16x128xf32>
    %272 = arith.mulf %271, %242 : vector<16x128xf32>
    %273 = arith.addf %269, %272 : vector<16x128xf32>
    %cst_104 = arith.constant dense<0.000000e+00> : vector<16xf32>
    %274 = vector.multi_reduction <add>, %273, %cst_104 [1] : vector<16x128xf32> to vector<16xf32>
    %275 = vector.shape_cast %274 : vector<16xf32> to vector<16x1xf32>
    %cst_105 = arith.constant 1.280000e+02 : f32
    %276 = vector.broadcast %cst_105 : f32 to vector<16x1xf32>
    %277 = arith.divf %275, %276 : vector<16x1xf32>
    %278 = vector.broadcast %277 : vector<16x1xf32> to vector<16x128xf32>
    %279 = arith.subf %273, %278 : vector<16x128xf32>
    %280 = arith.mulf %279, %279 : vector<16x128xf32>
    %cst_106 = arith.constant dense<0.000000e+00> : vector<16xf32>
    %281 = vector.multi_reduction <add>, %280, %cst_106 [1] : vector<16x128xf32> to vector<16xf32>
    %282 = vector.shape_cast %281 : vector<16xf32> to vector<16x1xf32>
    %cst_107 = arith.constant 1.280000e+02 : f32
    %283 = vector.broadcast %cst_107 : f32 to vector<16x1xf32>
    %284 = arith.divf %282, %283 : vector<16x1xf32>
    %cst_108 = arith.constant 9.99999974E-6 : f32
    %285 = vector.broadcast %cst_108 : f32 to vector<16x1xf32>
    %286 = arith.addf %284, %285 : vector<16x1xf32>
    %287 = math.rsqrt %286 : vector<16x1xf32>
    %288 = vector.broadcast %287 : vector<16x1xf32> to vector<16x128xf32>
    %289 = arith.mulf %279, %288 : vector<16x128xf32>
    %290 = vector.broadcast %267 : vector<1x128xf32> to vector<16x128xf32>
    %291 = arith.mulf %289, %290 : vector<16x128xf32>
    %292 = vector.broadcast %268 : vector<1x128xf32> to vector<16x128xf32>
    %293 = arith.addf %291, %292 : vector<16x128xf32>
    %cst_109 = arith.constant dense<0.000000e+00> : vector<16xf32>
    %294 = vector.multi_reduction <add>, %293, %cst_109 [1] : vector<16x128xf32> to vector<16xf32>
    %295 = vector.shape_cast %294 : vector<16xf32> to vector<16x1xf32>
    %cst_110 = arith.constant 1.280000e+02 : f32
    %296 = vector.broadcast %cst_110 : f32 to vector<16x1xf32>
    %297 = arith.divf %295, %296 : vector<16x1xf32>
    %298 = vector.broadcast %297 : vector<16x1xf32> to vector<16x128xf32>
    %299 = arith.subf %293, %298 : vector<16x128xf32>
    %300 = arith.mulf %299, %299 : vector<16x128xf32>
    %cst_111 = arith.constant dense<0.000000e+00> : vector<16xf32>
    %301 = vector.multi_reduction <add>, %300, %cst_111 [1] : vector<16x128xf32> to vector<16xf32>
    %302 = vector.shape_cast %301 : vector<16xf32> to vector<16x1xf32>
    %cst_112 = arith.constant 1.280000e+02 : f32
    %303 = vector.broadcast %cst_112 : f32 to vector<16x1xf32>
    %304 = arith.divf %302, %303 : vector<16x1xf32>
    %cst_113 = arith.constant 9.99999974E-6 : f32
    %305 = vector.broadcast %cst_113 : f32 to vector<16x1xf32>
    %306 = arith.addf %304, %305 : vector<16x1xf32>
    %307 = math.rsqrt %306 : vector<16x1xf32>
    %308 = vector.broadcast %307 : vector<16x1xf32> to vector<16x128xf32>
    %309 = arith.mulf %299, %308 : vector<16x128xf32>
    %c0_114 = arith.constant 0 : index
    %c128_115 = arith.constant 128 : index
    %310 = vector.load %arg4[%c0_114, %c128_115] : memref<128x384xbf16, #tpu.memory_space<vmem>>, vector<128x64xbf16>
    %c6 = arith.constant 6 : index
    %c0_116 = arith.constant 0 : index
    %311 = vector.load %arg3[%c6, %c0_116] : memref<16x256xf32, #tpu.memory_space<vmem>>, vector<1x64xf32>
    %c7 = arith.constant 7 : index
    %c0_117 = arith.constant 0 : index
    %312 = vector.load %arg3[%c7, %c0_117] : memref<16x256xf32, #tpu.memory_space<vmem>>, vector<1x256xf32>
    %313 = arith.truncf %309 : vector<16x128xf32> to vector<16x128xbf16>
    %cst_118 = arith.constant dense<0.000000e+00> : vector<16x64xf32>
    %314 = tpu.matmul %313, %310, %cst_118 {dimension_numbers = #tpu.dot_dimension_numbers<[1], [0], [0], [1], [0, 0, 1, 1], [], []>} : vector<16x128xbf16>, vector<128x64xbf16>, vector<16x64xf32> -> vector<16x64xf32>
    %315 = vector.broadcast %311 : vector<1x64xf32> to vector<16x64xf32>
    %316 = arith.addf %314, %315 : vector<16x64xf32>
    %cst_119 = arith.constant 0.000000e+00 : f32
    %317 = vector.broadcast %cst_119 : f32 to vector<16x64xf32>
    %318 = arith.maximumf %316, %317 : vector<16x64xf32>
    %c0_120 = arith.constant 0 : index
    %c768 = arith.constant 768 : index
    %319 = vector.load %arg6[%c0_120, %c768] : memref<64x1024xbf16, #tpu.memory_space<vmem>>, vector<64x256xbf16>
    %320 = arith.truncf %318 : vector<16x64xf32> to vector<16x64xbf16>
    %cst_121 = arith.constant dense<0.000000e+00> : vector<16x256xf32>
    %321 = tpu.matmul %320, %319, %cst_121 {dimension_numbers = #tpu.dot_dimension_numbers<[1], [0], [0], [1], [0, 0, 1, 1], [], []>} : vector<16x64xbf16>, vector<64x256xbf16>, vector<16x256xf32> -> vector<16x256xf32>
    %322 = vector.broadcast %312 : vector<1x256xf32> to vector<16x256xf32>
    %323 = arith.addf %321, %322 : vector<16x256xf32>
    %c0_122 = arith.constant 0 : index
    %c0_123 = arith.constant 0 : index
    %324 = vector.load %arg7[%c0_122, %c0_123] : memref<16x256xf32, #tpu.memory_space<vmem>>, vector<16x256xf32>
    tpu.vector_store %arg7[%c0_122, %c0_123], %323 {strides = array<i32>} : memref<16x256xf32, #tpu.memory_space<vmem>>, vector<16x256xf32>,
    %325 = vector.extract_strided_slice %293 {offsets = [0, 0], sizes = [8, 128], strides = [1, 1]} : vector<16x128xf32> to vector<8x128xf32>
    %cst_124 = arith.constant dense<0.000000e+00> : vector<128xf32>
    %326 = vector.multi_reduction <add>, %325, %cst_124 [0] : vector<8x128xf32> to vector<128xf32>
    %327 = vector.shape_cast %326 : vector<128xf32> to vector<1x128xf32>
    %cst_125 = arith.constant 8.000000e+00 : f32
    %328 = vector.broadcast %cst_125 : f32 to vector<1x128xf32>
    %329 = arith.divf %327, %328 : vector<1x128xf32>
    %330 = vector.extract_strided_slice %293 {offsets = [8, 0], sizes = [8, 128], strides = [1, 1]} : vector<16x128xf32> to vector<8x128xf32>
    %cst_126 = arith.constant dense<0.000000e+00> : vector<128xf32>
    %331 = vector.multi_reduction <add>, %330, %cst_126 [0] : vector<8x128xf32> to vector<128xf32>
    %332 = vector.shape_cast %331 : vector<128xf32> to vector<1x128xf32>
    %cst_127 = arith.constant 8.000000e+00 : f32
    %333 = vector.broadcast %cst_127 : f32 to vector<1x128xf32>
    %334 = arith.divf %332, %333 : vector<1x128xf32>
    %335 = tpu.concatenate %329, %334 in 0 : vector<1x128xf32>, vector<1x128xf32> -> vector<2x128xf32>
    %c0_128 = arith.constant 0 : index
    %c256_129 = arith.constant 256 : index
    %336 = vector.load %arg4[%c0_128, %c256_129] : memref<128x384xbf16, #tpu.memory_space<vmem>>, vector<128x128xbf16>
    %c15_130 = arith.constant 15 : index
    %c128_131 = arith.constant 128 : index
    %337 = vector.load %arg3[%c15_130, %c128_131] : memref<16x256xf32, #tpu.memory_space<vmem>>, vector<1x128xf32>
    %338 = arith.truncf %335 : vector<2x128xf32> to vector<2x128xbf16>
    %cst_132 = arith.constant dense<0.000000e+00> : vector<2x128xf32>
    %339 = tpu.matmul %338, %336, %cst_132 {dimension_numbers = #tpu.dot_dimension_numbers<[1], [0], [0], [1], [0, 0, 1, 1], [], []>} : vector<2x128xbf16>, vector<128x128xbf16>, vector<2x128xf32> -> vector<2x128xf32>
    %340 = vector.broadcast %337 : vector<1x128xf32> to vector<2x128xf32>
    %341 = arith.addf %339, %340 : vector<2x128xf32>
    %342 = tpu.concatenate %341, %335 in 1 : vector<2x128xf32>, vector<2x128xf32> -> vector<2x256xf32>
    %c0_133 = arith.constant 0 : index
    %c0_134 = arith.constant 0 : index
    %343 = vector.load %arg8[%c0_133, %c0_134] : memref<2x256xf32, #tpu.memory_space<vmem>>, vector<2x256xf32>
    tpu.vector_store %arg8[%c0_133, %c0_134], %342 {strides = array<i32>} : memref<2x256xf32, #tpu.memory_space<vmem>>, vector<2x256xf32>,
    return
  }
}

</mosaic_0001>

<llo_original>
// kernel: pmpl_forward.1
$region0: #{pmpl_forward.1}
  #allocation0 [shape = 'u32[]', space=smem, size = 0x4, offset = 0x4, fixed_abs, tag = 'smem constant byte address 0x4 - core index']
  #allocation1 [shape = 'u32[144,128]{1,0:T(1,128)}', space=vmem, size = 0x12000, scoped, tag = 'internal scratch']
  %s0 = inlined_call_operand.vmem [shape: f32[2,128], index: 0, kind: input, shape index: {}]
  %s1 = inlined_call_operand.vmem [shape: f32[2,128], index: 1, kind: input, shape index: {}]
  %s2 = inlined_call_operand.hbm [shape: f32[8,128], index: 2, kind: input, shape index: {}]
  %s3 = inlined_call_operand.hbm [shape: f32[16,256], index: 3, kind: input, shape index: {}]
  %s4 = inlined_call_operand.hbm [shape: bf16[128,384], index: 4, kind: input, shape index: {}]
  %s5 = inlined_call_operand.hbm [shape: bf16[256,256], index: 5, kind: input, shape index: {}]
  %s6 = inlined_call_operand.hbm [shape: bf16[64,1024], index: 6, kind: input, shape index: {}]
  %s7 = inlined_call_operand.vmem [shape: f32[16,256], index: 7, kind: output, shape index: {0}]
  %s8 = inlined_call_operand.vmem [shape: f32[2,256], index: 8, kind: output, shape index: {1}]
  %9 = xla_tuple %s7, %s8
  %s10 = sld [smem:[#allocation0]]
  $region66: #{pmpl_forward.1} parent=0
    _
  %s12 = ssub.s32 1, %s10
  %s13 = scalar_select 0, %s12, %s10
  $region1: #{pmpl_forward.1} parent=0
    #allocation2 [shape = 'u8[4096]{0}', space=vmem, size = 0x1000, scoped, tag = 'input window, operand 2, single buffered']
    #allocation3 [shape = 's32[1]{0}', space=sflag, size = 0x4, scoped, tag = 'scoped memory for pmpl_forward.1']
    #allocation4 [shape = 'u8[16384]{0}', space=vmem, size = 0x4000, scoped, tag = 'input window, operand 3, single buffered']
    #allocation5 [shape = 's32[1]{0}', space=sflag, size = 0x4, scoped, tag = 'scoped memory for pmpl_forward.1']
    #allocation6 [shape = 'u8[98304]{0}', space=vmem, size = 0x18000, scoped, tag = 'input window, operand 4, single buffered']
    #allocation7 [shape = 'u8[131072]{0}', space=vmem, size = 0x20000, scoped, tag = 'input window, operand 5, single buffered']
    #allocation8 [shape = 's32[1]{0}', space=sflag, size = 0x4, scoped, tag = 'scoped memory for pmpl_forward.1']
    #allocation9 [shape = 'u8[131072]{0}', space=vmem, size = 0x20000, scoped, tag = 'input window, operand 6, single buffered']
    %14 = vsyncpa [#allocation3], 0
    %15 = vsyncpa [#allocation5], 0
    %16 = vsyncpa [#allocation8], 0
    // Predicated region
    $region2: #{pmpl_forward.1} parent=1 // pred_check
      _
    $region3: #{pmpl_forward.1} parent=1 // pred_check_branch
      %18 = sbr.rel (0) target = $region5
    $region4: #{pmpl_forward.1} parent=1 // pred_region
      _
    $region5: #{pmpl_forward.1} parent=1 // pred_fallthru
      _
    // Predicated region
    $region6: #{pmpl_forward.1} parent=1 // pred_check
      _
    $region7: #{pmpl_forward.1} parent=1 // pred_check_branch
      %20 = sbr.rel (0) target = $region9
    $region8: #{pmpl_forward.1} parent=1 // pred_region
      _
    $region9: #{pmpl_forward.1} parent=1 // pred_fallthru
      _
    // Predicated region
    $region10: #{pmpl_forward.1} parent=1 // pred_check
      _
    $region11: #{pmpl_forward.1} parent=1 // pred_check_branch
      %22 = sbr.rel (0) target = $region13
    $region12: #{pmpl_forward.1} parent=1 // pred_region
      %s24 = ssub.s32 128, 128
      %25 = vsyncadd [#allocation3], %s24
      %s27 = sshll.u32 [#allocation2], 4
      %s28 = int_to_ptr.vmem [resolvable:$true] %s27
      %30 = dma.hbm_to_vmem [thread:$0]  %s2, 128, %s28, [#allocation3]
    $region13: #{pmpl_forward.1} parent=1 // pred_fallthru
      _
    // Predicated region
    $region14: #{pmpl_forward.1} parent=1 // pred_check
      _
    $region15: #{pmpl_forward.1} parent=1 // pred_check_branch
      %32 = sbr.rel (0) target = $region17
    $region16: #{pmpl_forward.1} parent=1 // pred_region
      %s34 = ssub.s32 512, 512
      %35 = vsyncadd [#allocation5], %s34
      %s36 = sshll.u32 [#allocation4], 4
      %s37 = int_to_ptr.vmem [resolvable:$true] %s36
      %42 = dma.hbm_to_vmem [thread:$0]  %s3, 512, %s37, [#allocation5], 256, 256, 16
    $region17: #{pmpl_forward.1} parent=1 // pred_fallthru
      _
    // Predicated region
    $region18: #{pmpl_forward.1} parent=1 // pred_check
      _
    $region19: #{pmpl_forward.1} parent=1 // pred_check_branch
      %44 = sbr.rel (0) target = $region21
    $region20: #{pmpl_forward.1} parent=1 // pred_region
      %s46 = ssub.s32 3072, 3072
      %47 = vsyncadd [#allocation5], %s46
      %s48 = sshll.u32 [#allocation6], 4
      %s49 = int_to_ptr.vmem [resolvable:$true] %s48
      %54 = dma.hbm_to_vmem [thread:$0]  %s4, 3072, %s49, [#allocation5], 192, 192, 12
    $region21: #{pmpl_forward.1} parent=1 // pred_fallthru
      _
    // Predicated region
    $region22: #{pmpl_forward.1} parent=1 // pred_check
      _
    $region23: #{pmpl_forward.1} parent=1 // pred_check_branch
      %56 = sbr.rel (0) target = $region25
    $region24: #{pmpl_forward.1} parent=1 // pred_region
      %s58 = ssub.s32 4096, 4096
      %59 = vsyncadd [#allocation8], %s58
      %s60 = sshll.u32 [#allocation7], 4
      %s61 = int_to_ptr.vmem [resolvable:$true] %s60
      %66 = dma.hbm_to_vmem [thread:$0]  %s5, 4096, %s61, [#allocation8], 128, 128, 8
    $region25: #{pmpl_forward.1} parent=1 // pred_fallthru
      _
    // Predicated region
    $region26: #{pmpl_forward.1} parent=1 // pred_check
      _
    $region27: #{pmpl_forward.1} parent=1 // pred_check_branch
      %68 = sbr.rel (0) target = $region29
    $region28: #{pmpl_forward.1} parent=1 // pred_region
      %s70 = ssub.s32 4096, 4096
      %71 = vsyncadd [#allocation8], %s70
      %s72 = sshll.u32 [#allocation9], 4
      %s73 = int_to_ptr.vmem [resolvable:$true] %s72
      %78 = dma.hbm_to_vmem [thread:$0]  %s6, 4096, %s73, [#allocation8], 512, 512, 32
    $region29: #{pmpl_forward.1} parent=1 // pred_fallthru
      _
    // Predicated region
    $region30: #{pmpl_forward.1} parent=1 // pred_check
      _
    $region31: #{pmpl_forward.1} parent=1 // pred_check_branch
      %80 = sbr.rel (0) target = $region33
    $region32: #{pmpl_forward.1} parent=1 // pred_region
      %81 = dma.done [#allocation3], 128
    $region33: #{pmpl_forward.1} parent=1 // pred_fallthru
      _
    // Predicated region
    $region34: #{pmpl_forward.1} parent=1 // pred_check
      _
    $region35: #{pmpl_forward.1} parent=1 // pred_check_branch
      %83 = sbr.rel (0) target = $region37
    $region36: #{pmpl_forward.1} parent=1 // pred_region
      %84 = dma.done [#allocation5], 512
    $region37: #{pmpl_forward.1} parent=1 // pred_fallthru
      _
    // Predicated region
    $region38: #{pmpl_forward.1} parent=1 // pred_check
      _
    $region39: #{pmpl_forward.1} parent=1 // pred_check_branch
      %86 = sbr.rel (0) target = $region41
    $region40: #{pmpl_forward.1} parent=1 // pred_region
      %87 = dma.done [#allocation5], 3072
    $region41: #{pmpl_forward.1} parent=1 // pred_fallthru
      _
    // Predicated region
    $region42: #{pmpl_forward.1} parent=1 // pred_check
      _
    $region43: #{pmpl_forward.1} parent=1 // pred_check_branch
      %89 = sbr.rel (0) target = $region45
    $region44: #{pmpl_forward.1} parent=1 // pred_region
      %90 = dma.done [#allocation8], 4096
    $region45: #{pmpl_forward.1} parent=1 // pred_fallthru
      _
    // Predicated region
    $region46: #{pmpl_forward.1} parent=1 // pred_check
      _
    $region47: #{pmpl_forward.1} parent=1 // pred_check_branch
      %92 = sbr.rel (0) target = $region49
    $region48: #{pmpl_forward.1} parent=1 // pred_region
      %93 = dma.done [#allocation8], 4096
    $region49: #{pmpl_forward.1} parent=1 // pred_fallthru
      _
    %v95 = vld [vmem:[%s0] sm:$0x3]
    %vm96 = vcmask 1041408
    %v97 = vsel %vm96, %v95, 0.0
    %98 = vadd.xlane.f32.xlu0 %v97
    %v99 = vpop.xlane.xlu0 %98
    %v100 = vrcp.pop 128.0
    %v101 = vmul.f32 %v99, %v100
    %v102 = vsub.f32 %v95, %v101
    %v103 = vmul.f32 %v102, %v102
    %v104 = vsel %vm96, %v103, 0.0
    %105 = vadd.xlane.f32.xlu0 %v104
    %v106 = vpop.xlane.xlu0 %105
    %v107 = vmul.f32 %v106, %v100
    %v108 = vadd.f32 %v107, 1e-05
    %v109 = vrsqrt.pop %v108
    %v110 = vmul.f32 %v102, %v109
    %v111 = vld [vmem:[%s1] sm:$0x3]
    %v112 = vsel %vm96, %v111, 0.0
    %113 = vadd.xlane.f32.xlu0 %v112
    %v114 = vpop.xlane.xlu0 %113
    %v115 = vmul.f32 %v114, %v100
    %v116 = vsub.f32 %v111, %v115
    %v117 = vmul.f32 %v116, %v116
    %v118 = vsel %vm96, %v117, 0.0
    %119 = vadd.xlane.f32.xlu0 %v118
    %v120 = vpop.xlane.xlu0 %119
    %v121 = vmul.f32 %v120, %v100
    %v122 = vadd.f32 %v121, 1e-05
    %v123 = vrsqrt.pop %v122
    %v124 = vmul.f32 %v116, %v123
    %v125 = vld [vmem:[#allocation2] sm:$0xff]
    %126 = vadd.xlane.f32.xlu0 %v125
    %v127 = vpop.xlane.xlu0 %126
    %v128 = vmul.f32 %v127, %v100
    %v129 = vsub.f32 %v125, %v128
    %v130 = vmul.f32 %v129, %v129
    %131 = vadd.xlane.f32.xlu0 %v130
    %v132 = vpop.xlane.xlu0 %131
    %v133 = vmul.f32 %v132, %v100
    %v134 = vadd.f32 %v133, 1e-05
    %v135 = vrsqrt.pop %v134
    %v136 = vmul.f32 %v129, %v135
    %v137 = vld [vmem:[#allocation7] sm:$0xf]
    %v138 = vld [vmem:[#allocation7 + $0x8] sm:$0xf]
    %v139 = vld [vmem:[#allocation7 + $0x10] sm:$0xf]
    %v140 = vld [vmem:[#allocation7 + $0x18] sm:$0xf]
    %v141 = vld [vmem:[#allocation7 + $0x20] sm:$0xf]
    %v142 = vld [vmem:[#allocation7 + $0x28] sm:$0xf]
    %v143 = vld [vmem:[#allocation7 + $0x30] sm:$0xf]
    %v144 = vld [vmem:[#allocation7 + $0x38] sm:$0xf]
    %v145 = vld [vmem:[#allocation7 + $0x40] sm:$0xf]
    %v146 = vld [vmem:[#allocation7 + $0x48] sm:$0xf]
    %v147 = vld [vmem:[#allocation7 + $0x50] sm:$0xf]
    %v148 = vld [vmem:[#allocation7 + $0x58] sm:$0xf]
    %v149 = vld [vmem:[#allocation7 + $0x60] sm:$0xf]
    %v150 = vld [vmem:[#allocation7 + $0x68] sm:$0xf]
    %v151 = vld [vmem:[#allocation7 + $0x70] sm:$0xf]
    %v152 = vld [vmem:[#allocation7 + $0x78] sm:$0xf]
    %v153 = vld [vmem:[#allocation7 + $0x80] sm:$0xf]
    %v154 = vld [vmem:[#allocation7 + $0x88] sm:$0xf]
    %v155 = vld [vmem:[#allocation7 + $0x90] sm:$0xf]
    %v156 = vld [vmem:[#allocation7 + $0x98] sm:$0xf]
    %v157 = vld [vmem:[#allocation7 + $0xa0] sm:$0xf]
    %v158 = vld [vmem:[#allocation7 + $0xa8] sm:$0xf]
    %v159 = vld [vmem:[#allocation7 + $0xb0] sm:$0xf]
    %v160 = vld [vmem:[#allocation7 + $0xb8] sm:$0xf]
    %v161 = vld [vmem:[#allocation7 + $0xc0] sm:$0xf]
    %v162 = vld [vmem:[#allocation7 + $0xc8] sm:$0xf]
    %v163 = vld [vmem:[#allocation7 + $0xd0] sm:$0xf]
    %v164 = vld [vmem:[#allocation7 + $0xd8] sm:$0xf]
    %v165 = vld [vmem:[#allocation7 + $0xe0] sm:$0xf]
    %v166 = vld [vmem:[#allocation7 + $0xe8] sm:$0xf]
    %v167 = vld [vmem:[#allocation7 + $0xf0] sm:$0xf]
    %v168 = vld [vmem:[#allocation7 + $0xf8] sm:$0xf]
    %v169 = vld [vmem:[#allocation4] ss:$0 sm:$0xff]
    %s170 = scalar_lea.vmem [#allocation4], 1
    %v171 = vld [vmem:[%s170] ss:$8 sm:$0x3]
    %v172 = vpack.c.bf16 %v110, %v110
    %v173 = vpack.c.bf16 %v124, %v124
    %v206 = vunpack.c.l.b16 %v137
    %v207 = vunpack.c.l.b16 %v138
    %v208 = vunpack.c.l.b16 %v139
    %v209 = vunpack.c.l.b16 %v140
    %v210 = vunpack.c.l.b16 %v141
    %v211 = vunpack.c.l.b16 %v142
    %v212 = vunpack.c.l.b16 %v143
    %v213 = vunpack.c.l.b16 %v144
    %v214 = vunpack.c.l.b16 %v145
    %v215 = vunpack.c.l.b16 %v146
    %v216 = vunpack.c.l.b16 %v147
    %v217 = vunpack.c.l.b16 %v148
    %v218 = vunpack.c.l.b16 %v149
    %v219 = vunpack.c.l.b16 %v150
    %v220 = vunpack.c.l.b16 %v151
    %v221 = vunpack.c.l.b16 %v152
    %v222 = vunpack.c.l.b16 %v153
    %v223 = vunpack.c.l.b16 %v154
    %v224 = vunpack.c.l.b16 %v155
    %v225 = vunpack.c.l.b16 %v156
    %v226 = vunpack.c.l.b16 %v157
    %v227 = vunpack.c.l.b16 %v158
    %v228 = vunpack.c.l.b16 %v159
    %v229 = vunpack.c.l.b16 %v160
    %v230 = vunpack.c.l.b16 %v161
    %v231 = vunpack.c.l.b16 %v162
    %v232 = vunpack.c.l.b16 %v163
    %v233 = vunpack.c.l.b16 %v164
    %v234 = vunpack.c.l.b16 %v165
    %v235 = vunpack.c.l.b16 %v166
    %v236 = vunpack.c.l.b16 %v167
    %v237 = vunpack.c.l.b16 %v168
    %v238 = vpack.c.b16 %v207, %v206
    %v239 = vpack.c.b16 %v209, %v208
    %v240 = vpack.c.b16 %v211, %v210
    %v241 = vpack.c.b16 %v213, %v212
    %v242 = vpack.c.b16 %v215, %v214
    %v243 = vpack.c.b16 %v217, %v216
    %v244 = vpack.c.b16 %v219, %v218
    %v245 = vpack.c.b16 %v221, %v220
    %v246 = vpack.c.b16 %v223, %v222
    %v247 = vpack.c.b16 %v225, %v224
    %v248 = vpack.c.b16 %v227, %v226
    %v249 = vpack.c.b16 %v229, %v228
    %v250 = vpack.c.b16 %v231, %v230
    %v251 = vpack.c.b16 %v233, %v232
    %v252 = vpack.c.b16 %v235, %v234
    %v253 = vpack.c.b16 %v237, %v236
    %270 = vmatprep.subr.bf16.mxu0 0
    %271 = vmatpush1.bf16.msra.mxu0 %v245
    %272 = vmatprep.subr.bf16.mxu0 0
    %273 = vmatpush1.bf16.msra.mxu0 %v244
    %274 = vmatprep.subr.bf16.mxu0 0
    %275 = vmatpush1.bf16.msra.mxu0 %v243
    %276 = vmatprep.subr.bf16.mxu0 0
    %277 = vmatpush1.bf16.msra.mxu0 %v242
    %278 = vmatprep.subr.bf16.mxu0 0
    %279 = vmatpush1.bf16.msra.mxu0 %v241
    %280 = vmatprep.subr.bf16.mxu0 0
    %281 = vmatpush1.bf16.msra.mxu0 %v240
    %282 = vmatprep.subr.bf16.mxu0 0
    %283 = vmatpush1.bf16.msra.mxu0 %v239
    %284 = vmatprep.subr.bf16.mxu0 0
    %285 = vmatpush1.bf16.msra.mxu0 %v238
    %286 = vmatprep.subr.bf16.mxu0 0
    %287 = vmatpush2.bf16.msra.mxu0 %v253
    %288 = vmatprep.subr.bf16.mxu0 0
    %289 = vmatpush2.bf16.msra.mxu0 %v252
    %290 = vmatprep.subr.bf16.mxu0 0
    %291 = vmatpush2.bf16.msra.mxu0 %v251
    %292 = vmatprep.subr.bf16.mxu0 0
    %293 = vmatpush2.bf16.msra.mxu0 %v250
    %294 = vmatprep.subr.bf16.mxu0 0
    %295 = vmatpush2.bf16.msra.mxu0 %v249
    %296 = vmatprep.subr.bf16.mxu0 0
    %297 = vmatpush2.bf16.msra.mxu0 %v248
    %298 = vmatprep.subr.bf16.mxu0 0
    %299 = vmatpush2.bf16.msra.mxu0 %v247
    %300 = vmatprep.subr.bf16.mxu0 0
    %301 = vmatpush2.bf16.msra.mxu0 %v246
    %302 = vmatprep.mubr.bf16.mxu0 %v173
    %303 = vmatmul.mubr.bf16.gmra.mxu0 %v172
    %v304 = vpop.f32.mrf.mxu0
    %v305 = vadd.f32 %v169, %v304
    %v306 = vpop.f32.mrf.mxu0
    %v307 = vpop.f32.mrf.mxu0
    %v308 = vpop.f32.mrf.mxu0
    %309 = vdwg.mxu0
    %v310 = vmax.f32 %v305, 0.0
    %v311 = vld [vmem:[#allocation9] sm:$0xff]
    %v312 = vld [vmem:[#allocation9 + $0x20] sm:$0xff]
    %v313 = vld [vmem:[#allocation9 + $0x40] sm:$0xff]
    %v314 = vld [vmem:[#allocation9 + $0x60] sm:$0xff]
    %v315 = vld [vmem:[#allocation9 + $0x80] sm:$0xff]
    %v316 = vld [vmem:[#allocation9 + $0xa0] sm:$0xff]
    %v317 = vld [vmem:[#allocation9 + $0xc0] sm:$0xff]
    %v318 = vld [vmem:[#allocation9 + $0xe0] sm:$0xff]
    %v319 = vpack.c.bf16 %v310, %v310
    %v321 = vlaneseq
    %v322 = vshrl.u32 %v321, 7
    %v323 = vsub.s32 0, %v322
    %v324 = vrot.slane %v171, %v323
    %v325 = vlaneseq
    %v326 = vshrl.u32 %v325, 7
    %v327 = vsub.s32 1, %v326
    %v328 = vrot.slane %v171, %v327
    %v339 = vunpack.c.l.b16 %v311
    %v340 = vunpack.c.h.b16 %v311
    %v341 = vunpack.c.l.b16 %v312
    %v342 = vunpack.c.h.b16 %v312
    %v343 = vunpack.c.l.b16 %v313
    %v344 = vunpack.c.h.b16 %v313
    %v345 = vunpack.c.l.b16 %v314
    %v346 = vunpack.c.h.b16 %v314
    %v347 = vunpack.c.l.b16 %v315
    %v348 = vunpack.c.h.b16 %v315
    %v349 = vunpack.c.l.b16 %v316
    %v350 = vunpack.c.h.b16 %v316
    %v351 = vunpack.c.l.b16 %v317
    %v352 = vunpack.c.h.b16 %v317
    %v353 = vunpack.c.l.b16 %v318
    %v354 = vunpack.c.h.b16 %v318
    %v355 = vpack.c.b16 %v341, %v339
    %v356 = vpack.c.b16 %v342, %v340
    %v357 = vpack.c.b16 %v345, %v343
    %v358 = vpack.c.b16 %v346, %v344
    %v359 = vpack.c.b16 %v349, %v347
    %v360 = vpack.c.b16 %v350, %v348
    %v361 = vpack.c.b16 %v353, %v351
    %v362 = vpack.c.b16 %v354, %v352
    %vm371 = vcmask 523264
    %v373 = vsel %vm371, %v319, 0
    %375 = vmatprep.subr.bf16.mxu0 0
    %376 = vmatpush1.bf16.msra.mxu0 0
    %377 = vmatprep.subr.bf16.mxu0 0
    %378 = vmatpush1.bf16.msra.mxu0 0
    %379 = vmatprep.subr.bf16.mxu0 0
    %380 = vmatpush1.bf16.msra.mxu0 0
    %381 = vmatprep.subr.bf16.mxu0 0
    %382 = vmatpush1.bf16.msra.mxu0 0
    %383 = vmatprep.subr.bf16.mxu0 %v362
    %384 = vmatpush1.bf16.msra.mxu0 %v361
    %385 = vmatprep.subr.bf16.mxu0 %v360
    %386 = vmatpush1.bf16.msra.mxu0 %v359
    %387 = vmatprep.subr.bf16.mxu0 %v358
    %388 = vmatpush1.bf16.msra.mxu0 %v357
    %389 = vmatprep.subr.bf16.mxu0 %v356
    %390 = vmatpush1.bf16.msra.mxu0 %v355
    %391 = vmatprep.subr.bf16.mxu0 0
    %392 = vmatpush2.bf16.msra.mxu0 0
    %393 = vmatprep.subr.bf16.mxu0 0
    %394 = vmatpush2.bf16.msra.mxu0 0
    %395 = vmatprep.subr.bf16.mxu0 0
    %396 = vmatpush2.bf16.msra.mxu0 0
    %397 = vmatprep.subr.bf16.mxu0 0
    %398 = vmatpush2.bf16.msra.mxu0 0
    %399 = vmatprep.subr.bf16.mxu0 0
    %400 = vmatpush2.bf16.msra.mxu0 0
    %401 = vmatprep.subr.bf16.mxu0 0
    %402 = vmatpush2.bf16.msra.mxu0 0
    %403 = vmatprep.subr.bf16.mxu0 0
    %404 = vmatpush2.bf16.msra.mxu0 0
    %405 = vmatprep.subr.bf16.mxu0 0
    %406 = vmatpush2.bf16.msra.mxu0 0
    %407 = vmatprep.mubr.bf16.mxu0 0
    %408 = vmatmul.mubr.bf16.gmra.mxu0 %v373
    %v409 = vpop.f32.mrf.mxu0
    %v410 = vadd.f32 %v324, %v409
    %v411 = vpop.f32.mrf.mxu0
    %v412 = vadd.f32 %v328, %v411
    %v413 = vpop.f32.mrf.mxu0
    %v414 = vpop.f32.mrf.mxu0
    %415 = vdwg.mxu0
    %v416 = vld [vmem:[#allocation6] sm:$0xf]
    %v417 = vld [vmem:[#allocation6 + $0xc] sm:$0xf]
    %v418 = vld [vmem:[#allocation6 + $0x18] sm:$0xf]
    %v419 = vld [vmem:[#allocation6 + $0x24] sm:$0xf]
    %v420 = vld [vmem:[#allocation6 + $0x30] sm:$0xf]
    %v421 = vld [vmem:[#allocation6 + $0x3c] sm:$0xf]
    %v422 = vld [vmem:[#allocation6 + $0x48] sm:$0xf]
    %v423 = vld [vmem:[#allocation6 + $0x54] sm:$0xf]
    %v424 = vld [vmem:[#allocation6 + $0x60] sm:$0xf]
    %v425 = vld [vmem:[#allocation6 + $0x6c] sm:$0xf]
    %v426 = vld [vmem:[#allocation6 + $0x78] sm:$0xf]
    %v427 = vld [vmem:[#allocation6 + $0x84] sm:$0xf]
    %v428 = vld [vmem:[#allocation6 + $0x90] sm:$0xf]
    %v429 = vld [vmem:[#allocation6 + $0x9c] sm:$0xf]
    %v430 = vld [vmem:[#allocation6 + $0xa8] sm:$0xf]
    %v431 = vld [vmem:[#allocation6 + $0xb4] sm:$0xf]
    %v432 = vld [vmem:[#allocation4 + $0x2] ss:$0 sm:$0xff]
    %s433 = scalar_lea.vmem [#allocation4], 3
    %v434 = vld [vmem:[%s433] ss:$8 sm:$0x3]
    %v435 = vpack.c.bf16 %v136, %v136
    %v452 = vunpack.c.l.b16 %v416
    %v453 = vunpack.c.l.b16 %v417
    %v454 = vunpack.c.l.b16 %v418
    %v455 = vunpack.c.l.b16 %v419
    %v456 = vunpack.c.l.b16 %v420
    %v457 = vunpack.c.l.b16 %v421
    %v458 = vunpack.c.l.b16 %v422
    %v459 = vunpack.c.l.b16 %v423
    %v460 = vunpack.c.l.b16 %v424
    %v461 = vunpack.c.l.b16 %v425
    %v462 = vunpack.c.l.b16 %v426
    %v463 = vunpack.c.l.b16 %v427
    %v464 = vunpack.c.l.b16 %v428
    %v465 = vunpack.c.l.b16 %v429
    %v466 = vunpack.c.l.b16 %v430
    %v467 = vunpack.c.l.b16 %v431
    %v468 = vpack.c.b16 %v453, %v452
    %v469 = vpack.c.b16 %v455, %v454
    %v470 = vpack.c.b16 %v457, %v456
    %v471 = vpack.c.b16 %v459, %v458
    %v472 = vpack.c.b16 %v461, %v460
    %v473 = vpack.c.b16 %v463, %v462
    %v474 = vpack.c.b16 %v465, %v464
    %v475 = vpack.c.b16 %v467, %v466
    %484 = vmatprep.subr.bf16.mxu0 0
    %485 = vmatpush1.bf16.msra.mxu0 %v475
    %486 = vmatprep.subr.bf16.mxu0 0
    %487 = vmatpush1.bf16.msra.mxu0 %v474
    %488 = vmatprep.subr.bf16.mxu0 0
    %489 = vmatpush1.bf16.msra.mxu0 %v473
    %490 = vmatprep.subr.bf16.mxu0 0
    %491 = vmatpush1.bf16.msra.mxu0 %v472
    %492 = vmatprep.subr.bf16.mxu0 0
    %493 = vmatpush1.bf16.msra.mxu0 %v471
    %494 = vmatprep.subr.bf16.mxu0 0
    %495 = vmatpush1.bf16.msra.mxu0 %v470
    %496 = vmatprep.subr.bf16.mxu0 0
    %497 = vmatpush1.bf16.msra.mxu0 %v469
    %498 = vmatprep.subr.bf16.mxu0 0
    %499 = vmatpush1.bf16.msra.mxu0 %v468
    %500 = vmatprep.subr.bf16.mxu0 0
    %501 = vmatpush2.bf16.msra.mxu0 0
    %502 = vmatprep.subr.bf16.mxu0 0
    %503 = vmatpush2.bf16.msra.mxu0 0
    %504 = vmatprep.subr.bf16.mxu0 0
    %505 = vmatpush2.bf16.msra.mxu0 0
    %506 = vmatprep.subr.bf16.mxu0 0
    %507 = vmatpush2.bf16.msra.mxu0 0
    %508 = vmatprep.subr.bf16.mxu0 0
    %509 = vmatpush2.bf16.msra.mxu0 0
    %510 = vmatprep.subr.bf16.mxu0 0
    %511 = vmatpush2.bf16.msra.mxu0 0
    %512 = vmatprep.subr.bf16.mxu0 0
    %513 = vmatpush2.bf16.msra.mxu0 0
    %514 = vmatprep.subr.bf16.mxu0 0
    %515 = vmatpush2.bf16.msra.mxu0 0
    %516 = vmatprep.mubr.bf16.mxu0 0
    %517 = vmatmul.mubr.bf16.gmra.mxu0 %v435
    %v518 = vpop.f32.mrf.mxu0
    %v519 = vadd.f32 %v432, %v518
    %v520 = vpop.f32.mrf.mxu0
    %v521 = vpop.f32.mrf.mxu0
    %v522 = vpop.f32.mrf.mxu0
    %523 = vdwg.mxu0
    %v524 = vmax.f32 %v519, 0.0
    %v525 = vld [vmem:[#allocation9 + $0x8] sm:$0xff]
    %v526 = vld [vmem:[#allocation9 + $0x28] sm:$0xff]
    %v527 = vld [vmem:[#allocation9 + $0x48] sm:$0xff]
    %v528 = vld [vmem:[#allocation9 + $0x68] sm:$0xff]
    %v529 = vld [vmem:[#allocation9 + $0x88] sm:$0xff]
    %v530 = vld [vmem:[#allocation9 + $0xa8] sm:$0xff]
    %v531 = vld [vmem:[#allocation9 + $0xc8] sm:$0xff]
    %v532 = vld [vmem:[#allocation9 + $0xe8] sm:$0xff]
    %v533 = vpack.c.bf16 %v524, %v524
    %v535 = vlaneseq
    %v536 = vshrl.u32 %v535, 7
    %v537 = vsub.s32 0, %v536
    %v538 = vrot.slane %v434, %v537
    %v539 = vlaneseq
    %v540 = vshrl.u32 %v539, 7
    %v541 = vsub.s32 1, %v540
    %v542 = vrot.slane %v434, %v541
    %v553 = vunpack.c.l.b16 %v525
    %v554 = vunpack.c.h.b16 %v525
    %v555 = vunpack.c.l.b16 %v526
    %v556 = vunpack.c.h.b16 %v526
    %v557 = vunpack.c.l.b16 %v527
    %v558 = vunpack.c.h.b16 %v527
    %v559 = vunpack.c.l.b16 %v528
    %v560 = vunpack.c.h.b16 %v528
    %v561 = vunpack.c.l.b16 %v529
    %v562 = vunpack.c.h.b16 %v529
    %v563 = vunpack.c.l.b16 %v530
    %v564 = vunpack.c.h.b16 %v530
    %v565 = vunpack.c.l.b16 %v531
    %v566 = vunpack.c.h.b16 %v531
    %v567 = vunpack.c.l.b16 %v532
    %v568 = vunpack.c.h.b16 %v532
    %v569 = vpack.c.b16 %v555, %v553
    %v570 = vpack.c.b16 %v556, %v554
    %v571 = vpack.c.b16 %v559, %v557
    %v572 = vpack.c.b16 %v560, %v558
    %v573 = vpack.c.b16 %v563, %v561
    %v574 = vpack.c.b16 %v564, %v562
    %v575 = vpack.c.b16 %v567, %v565
    %v576 = vpack.c.b16 %v568, %v566
    %v586 = vsel %vm371, %v533, 0
    %588 = vmatprep.subr.bf16.mxu0 0
    %589 = vmatpush1.bf16.msra.mxu0 0
    %590 = vmatprep.subr.bf16.mxu0 0
    %591 = vmatpush1.bf16.msra.mxu0 0
    %592 = vmatprep.subr.bf16.mxu0 0
    %593 = vmatpush1.bf16.msra.mxu0 0
    %594 = vmatprep.subr.bf16.mxu0 0
    %595 = vmatpush1.bf16.msra.mxu0 0
    %596 = vmatprep.subr.bf16.mxu0 %v576
    %597 = vmatpush1.bf16.msra.mxu0 %v575
    %598 = vmatprep.subr.bf16.mxu0 %v574
    %599 = vmatpush1.bf16.msra.mxu0 %v573
    %600 = vmatprep.subr.bf16.mxu0 %v572
    %601 = vmatpush1.bf16.msra.mxu0 %v571
    %602 = vmatprep.subr.bf16.mxu0 %v570
    %603 = vmatpush1.bf16.msra.mxu0 %v569
    %604 = vmatprep.subr.bf16.mxu0 0
    %605 = vmatpush2.bf16.msra.mxu0 0
    %606 = vmatprep.subr.bf16.mxu0 0
    %607 = vmatpush2.bf16.msra.mxu0 0
    %608 = vmatprep.subr.bf16.mxu0 0
    %609 = vmatpush2.bf16.msra.mxu0 0
    %610 = vmatprep.subr.bf16.mxu0 0
    %611 = vmatpush2.bf16.msra.mxu0 0
    %612 = vmatprep.subr.bf16.mxu0 0
    %613 = vmatpush2.bf16.msra.mxu0 0
    %614 = vmatprep.subr.bf16.mxu0 0
    %615 = vmatpush2.bf16.msra.mxu0 0
    %616 = vmatprep.subr.bf16.mxu0 0
    %617 = vmatpush2.bf16.msra.mxu0 0
    %618 = vmatprep.subr.bf16.mxu0 0
    %619 = vmatpush2.bf16.msra.mxu0 0
    %620 = vmatprep.mubr.bf16.mxu0 0
    %621 = vmatmul.mubr.bf16.gmra.mxu0 %v586
    %v622 = vpop.f32.mrf.mxu0
    %v623 = vadd.f32 %v538, %v622
    %v624 = vpop.f32.mrf.mxu0
    %v625 = vadd.f32 %v542, %v624
    %v626 = vpop.f32.mrf.mxu0
    %v627 = vpop.f32.mrf.mxu0
    %628 = vdwg.mxu0
    %v629 = vlaneseq
    %v630 = vshrl.u32 %v629, 7
    %v631 = vsub.s32 0, %v630
    %v632 = vrot.slane %v410, %v631
    %v633 = vlaneseq
    %v634 = vshrl.u32 %v633, 7
    %v635 = vsub.s32 0, %v634
    %v636 = vrot.slane %v412, %v635
    %v637 = vlaneseq
    %v638 = vshrl.u32 %v637, 7
    %v639 = vsub.s32 1, %v638
    %v640 = vrot.slane %v410, %v639
    %v641 = vlaneseq
    %v642 = vshrl.u32 %v641, 7
    %v643 = vsub.s32 1, %v642
    %v644 = vrot.slane %v412, %v643
    %v645 = vld [vmem:[#allocation4 + $0x10] ss:$0 sm:$0xff]
    %v646 = vld [vmem:[#allocation4 + $0x18] ss:$0 sm:$0xff]
    %v647 = vld [vmem:[#allocation4 + $0x16] ss:$0 sm:$0xff]
    %v648 = vmul.f32 %v632, %v645
    %v649 = vmul.f32 %v640, %v645
    %650 = vadd.xlane.f32.xlu0 %v648
    %v651 = vpop.xlane.xlu0 %650
    %652 = vadd.xlane.f32.xlu0 %v649
    %v653 = vpop.xlane.xlu0 %652
    %v654 = vmul.f32 %v623, %v646
    %655 = vadd.xlane.f32.xlu0 %v654
    %v656 = vpop.xlane.xlu0 %655
    %v657 = vadd.f32 %v651, %v656
    %v658 = vadd.f32 %v653, %v656
    %v659 = vadd.f32 %v657, %v647
    %v660 = vadd.f32 %v658, %v647
    %v661 = vxor.u32 %v659, 2147483648
    %v662 = vxor.u32 %v660, 2147483648
    %v663 = vmul.f32 %v661, 1.442695
    %v664 = vpow.pop %v663
    %v665 = vmul.f32 %v662, 1.442695
    %v666 = vpow.pop %v665
    %v667 = vadd.f32 %v664, 1.0
    %v668 = vadd.f32 %v666, 1.0
    %v669 = vrcp.pop %v667
    %v670 = vmul.f32 1.0, %v669
    %v671 = vrcp.pop %v668
    %v672 = vmul.f32 1.0, %v671
    %v673 = vmax.f32 %v670, 0.15
    %v674 = vmax.f32 %v672, 0.15
    %v675 = vmin.f32 %v673, 0.85
    %v676 = vmin.f32 %v674, 0.85
    %v677 = vld [vmem:[#allocation4 + $0x11] ss:$0 sm:$0xff]
    %v678 = vld [vmem:[#allocation4 + $0x19] ss:$0 sm:$0xff]
    %v679 = vmul.f32 %v632, %v675
    %v680 = vmul.f32 %v640, %v676
    %v681 = vsub.f32 1.0, %v675
    %v682 = vsub.f32 1.0, %v676
    %v683 = vmul.f32 %v681, %v623
    %v684 = vmul.f32 %v682, %v623
    %v685 = vadd.f32 %v679, %v683
    %v686 = vadd.f32 %v680, %v684
    %687 = vadd.xlane.f32.xlu0 %v685
    %v688 = vpop.xlane.xlu0 %687
    %689 = vadd.xlane.f32.xlu0 %v686
    %v690 = vpop.xlane.xlu0 %689
    %v691 = vmul.f32 %v688, %v100
    %v692 = vmul.f32 %v690, %v100
    %v693 = vsub.f32 %v685, %v691
    %v694 = vsub.f32 %v686, %v692
    %v695 = vmul.f32 %v693, %v693
    %v696 = vmul.f32 %v694, %v694
    %697 = vadd.xlane.f32.xlu0 %v695
    %v698 = vpop.xlane.xlu0 %697
    %699 = vadd.xlane.f32.xlu0 %v696
    %v700 = vpop.xlane.xlu0 %699
    %v701 = vmul.f32 %v698, %v100
    %v702 = vmul.f32 %v700, %v100
    %v703 = vadd.f32 %v701, 1e-05
    %v704 = vadd.f32 %v702, 1e-05
    %v705 = vrsqrt.pop %v703
    %v706 = vrsqrt.pop %v704
    %v707 = vmul.f32 %v693, %v705
    %v708 = vmul.f32 %v694, %v706
    %v709 = vmul.f32 %v707, %v677
    %v710 = vmul.f32 %v708, %v677
    %v711 = vadd.f32 %v709, %v678
    %v712 = vadd.f32 %v710, %v678
    %v713 = vld [vmem:[#allocation4 + $0x12] ss:$0 sm:$0xff]
    %v714 = vld [vmem:[#allocation4 + $0x1a] ss:$0 sm:$0xff]
    %v715 = vld [vmem:[#allocation4 + $0x1e] ss:$0 sm:$0xff]
    %v716 = vmul.f32 %v636, %v713
    %v717 = vmul.f32 %v644, %v713
    %718 = vadd.xlane.f32.xlu0 %v716
    %v719 = vpop.xlane.xlu0 %718
    %720 = vadd.xlane.f32.xlu0 %v717
    %v721 = vpop.xlane.xlu0 %720
    %v722 = vmul.f32 %v625, %v714
    %723 = vadd.xlane.f32.xlu0 %v722
    %v724 = vpop.xlane.xlu0 %723
    %v725 = vadd.f32 %v719, %v724
    %v726 = vadd.f32 %v721, %v724
    %v727 = vadd.f32 %v725, %v715
    %v728 = vadd.f32 %v726, %v715
    %v729 = vxor.u32 %v727, 2147483648
    %v730 = vxor.u32 %v728, 2147483648
    %v731 = vmul.f32 %v729, 1.442695
    %v732 = vpow.pop %v731
    %v733 = vmul.f32 %v730, 1.442695
    %v734 = vpow.pop %v733
    %v735 = vadd.f32 %v732, 1.0
    %v736 = vadd.f32 %v734, 1.0
    %v737 = vrcp.pop %v735
    %v738 = vmul.f32 1.0, %v737
    %v739 = vrcp.pop %v736
    %v740 = vmul.f32 1.0, %v739
    %v741 = vmax.f32 %v738, 0.15
    %v742 = vmax.f32 %v740, 0.15
    %v743 = vmin.f32 %v741, 0.85
    %v744 = vmin.f32 %v742, 0.85
    %v745 = vld [vmem:[#allocation4 + $0x13] ss:$0 sm:$0xff]
    %v746 = vld [vmem:[#allocation4 + $0x1b] ss:$0 sm:$0xff]
    %v747 = vmul.f32 %v636, %v743
    %v748 = vmul.f32 %v644, %v744
    %v749 = vsub.f32 1.0, %v743
    %v750 = vsub.f32 1.0, %v744
    %v751 = vmul.f32 %v749, %v625
    %v752 = vmul.f32 %v750, %v625
    %v753 = vadd.f32 %v747, %v751
    %v754 = vadd.f32 %v748, %v752
    %755 = vadd.xlane.f32.xlu0 %v753
    %v756 = vpop.xlane.xlu0 %755
    %757 = vadd.xlane.f32.xlu0 %v754
    %v758 = vpop.xlane.xlu0 %757
    %v759 = vmul.f32 %v756, %v100
    %v760 = vmul.f32 %v758, %v100
    %v761 = vsub.f32 %v753, %v759
    %v762 = vsub.f32 %v754, %v760
    %v763 = vmul.f32 %v761, %v761
    %v764 = vmul.f32 %v762, %v762
    %765 = vadd.xlane.f32.xlu0 %v763
    %v766 = vpop.xlane.xlu0 %765
    %767 = vadd.xlane.f32.xlu0 %v764
    %v768 = vpop.xlane.xlu0 %767
    %v769 = vmul.f32 %v766, %v100
    %v770 = vmul.f32 %v768, %v100
    %v771 = vadd.f32 %v769, 1e-05
    %v772 = vadd.f32 %v770, 1e-05
    %v773 = vrsqrt.pop %v771
    %v774 = vrsqrt.pop %v772
    %v775 = vmul.f32 %v761, %v773
    %v776 = vmul.f32 %v762, %v774
    %v777 = vmul.f32 %v775, %v745
    %v778 = vmul.f32 %v776, %v745
    %v779 = vadd.f32 %v777, %v746
    %v780 = vadd.f32 %v778, %v746
    %781 = vadd.xlane.f32.xlu0 %v711
    %v782 = vpop.xlane.xlu0 %781
    %783 = vadd.xlane.f32.xlu0 %v712
    %v784 = vpop.xlane.xlu0 %783
    %v785 = vmul.f32 %v782, %v100
    %v786 = vmul.f32 %v784, %v100
    %v787 = vsub.f32 %v711, %v785
    %v788 = vsub.f32 %v712, %v786
    %v789 = vmul.f32 %v787, %v787
    %v790 = vmul.f32 %v788, %v788
    %791 = vadd.xlane.f32.xlu0 %v789
    %v792 = vpop.xlane.xlu0 %791
    %793 = vadd.xlane.f32.xlu0 %v790
    %v794 = vpop.xlane.xlu0 %793
    %v795 = vmul.f32 %v792, %v100
    %v796 = vmul.f32 %v794, %v100
    %v797 = vadd.f32 %v795, 1e-05
    %v798 = vadd.f32 %v796, 1e-05
    %v799 = vrsqrt.pop %v797
    %v800 = vrsqrt.pop %v798
    %v801 = vmul.f32 %v787, %v799
    %v802 = vmul.f32 %v788, %v800
    %803 = vadd.xlane.f32.xlu0 %v779
    %v804 = vpop.xlane.xlu0 %803
    %805 = vadd.xlane.f32.xlu0 %v780
    %v806 = vpop.xlane.xlu0 %805
    %v807 = vmul.f32 %v804, %v100
    %v808 = vmul.f32 %v806, %v100
    %v809 = vsub.f32 %v779, %v807
    %v810 = vsub.f32 %v780, %v808
    %v811 = vmul.f32 %v809, %v809
    %v812 = vmul.f32 %v810, %v810
    %813 = vadd.xlane.f32.xlu0 %v811
    %v814 = vpop.xlane.xlu0 %813
    %815 = vadd.xlane.f32.xlu0 %v812
    %v816 = vpop.xlane.xlu0 %815
    %v817 = vmul.f32 %v814, %v100
    %v818 = vmul.f32 %v816, %v100
    %v819 = vadd.f32 %v817, 1e-05
    %v820 = vadd.f32 %v818, 1e-05
    %v821 = vrsqrt.pop %v819
    %v822 = vrsqrt.pop %v820
    %v823 = vmul.f32 %v809, %v821
    %v824 = vmul.f32 %v810, %v822
    %v825 = vld [vmem:[#allocation7 + $0x4] sm:$0xf]
    %v826 = vld [vmem:[#allocation7 + $0xc] sm:$0xf]
    %v827 = vld [vmem:[#allocation7 + $0x14] sm:$0xf]
    %v828 = vld [vmem:[#allocation7 + $0x1c] sm:$0xf]
    %v829 = vld [vmem:[#allocation7 + $0x24] sm:$0xf]
    %v830 = vld [vmem:[#allocation7 + $0x2c] sm:$0xf]
    %v831 = vld [vmem:[#allocation7 + $0x34] sm:$0xf]
    %v832 = vld [vmem:[#allocation7 + $0x3c] sm:$0xf]
    %v833 = vld [vmem:[#allocation7 + $0x44] sm:$0xf]
    %v834 = vld [vmem:[#allocation7 + $0x4c] sm:$0xf]
    %v835 = vld [vmem:[#allocation7 + $0x54] sm:$0xf]
    %v836 = vld [vmem:[#allocation7 + $0x5c] sm:$0xf]
    %v837 = vld [vmem:[#allocation7 + $0x64] sm:$0xf]
    %v838 = vld [vmem:[#allocation7 + $0x6c] sm:$0xf]
    %v839 = vld [vmem:[#allocation7 + $0x74] sm:$0xf]
    %v840 = vld [vmem:[#allocation7 + $0x7c] sm:$0xf]
    %v841 = vld [vmem:[#allocation7 + $0x84] sm:$0xf]
    %v842 = vld [vmem:[#allocation7 + $0x8c] sm:$0xf]
    %v843 = vld [vmem:[#allocation7 + $0x94] sm:$0xf]
    %v844 = vld [vmem:[#allocation7 + $0x9c] sm:$0xf]
    %v845 = vld [vmem:[#allocation7 + $0xa4] sm:$0xf]
    %v846 = vld [vmem:[#allocation7 + $0xac] sm:$0xf]
    %v847 = vld [vmem:[#allocation7 + $0xb4] sm:$0xf]
    %v848 = vld [vmem:[#allocation7 + $0xbc] sm:$0xf]
    %v849 = vld [vmem:[#allocation7 + $0xc4] sm:$0xf]
    %v850 = vld [vmem:[#allocation7 + $0xcc] sm:$0xf]
    %v851 = vld [vmem:[#allocation7 + $0xd4] sm:$0xf]
    %v852 = vld [vmem:[#allocation7 + $0xdc] sm:$0xf]
    %v853 = vld [vmem:[#allocation7 + $0xe4] sm:$0xf]
    %v854 = vld [vmem:[#allocation7 + $0xec] sm:$0xf]
    %v855 = vld [vmem:[#allocation7 + $0xf4] sm:$0xf]
    %v856 = vld [vmem:[#allocation7 + $0xfc] sm:$0xf]
    %v857 = vld [vmem:[#allocation4 + $0x4] ss:$0 sm:$0xff]
    %s858 = scalar_lea.vmem [#allocation4], 5
    %v859 = vld [vmem:[%s858] ss:$8 sm:$0x3]
    %v860 = vpack.c.bf16 %v802, %v801
    %v861 = vpack.c.bf16 %v824, %v823
    %v894 = vunpack.c.l.b16 %v825
    %v895 = vunpack.c.l.b16 %v826
    %v896 = vunpack.c.l.b16 %v827
    %v897 = vunpack.c.l.b16 %v828
    %v898 = vunpack.c.l.b16 %v829
    %v899 = vunpack.c.l.b16 %v830
    %v900 = vunpack.c.l.b16 %v831
    %v901 = vunpack.c.l.b16 %v832
    %v902 = vunpack.c.l.b16 %v833
    %v903 = vunpack.c.l.b16 %v834
    %v904 = vunpack.c.l.b16 %v835
    %v905 = vunpack.c.l.b16 %v836
    %v906 = vunpack.c.l.b16 %v837
    %v907 = vunpack.c.l.b16 %v838
    %v908 = vunpack.c.l.b16 %v839
    %v909 = vunpack.c.l.b16 %v840
    %v910 = vunpack.c.l.b16 %v841
    %v911 = vunpack.c.l.b16 %v842
    %v912 = vunpack.c.l.b16 %v843
    %v913 = vunpack.c.l.b16 %v844
    %v914 = vunpack.c.l.b16 %v845
    %v915 = vunpack.c.l.b16 %v846
    %v916 = vunpack.c.l.b16 %v847
    %v917 = vunpack.c.l.b16 %v848
    %v918 = vunpack.c.l.b16 %v849
    %v919 = vunpack.c.l.b16 %v850
    %v920 = vunpack.c.l.b16 %v851
    %v921 = vunpack.c.l.b16 %v852
    %v922 = vunpack.c.l.b16 %v853
    %v923 = vunpack.c.l.b16 %v854
    %v924 = vunpack.c.l.b16 %v855
    %v925 = vunpack.c.l.b16 %v856
    %v926 = vpack.c.b16 %v895, %v894
    %v927 = vpack.c.b16 %v897, %v896
    %v928 = vpack.c.b16 %v899, %v898
    %v929 = vpack.c.b16 %v901, %v900
    %v930 = vpack.c.b16 %v903, %v902
    %v931 = vpack.c.b16 %v905, %v904
    %v932 = vpack.c.b16 %v907, %v906
    %v933 = vpack.c.b16 %v909, %v908
    %v934 = vpack.c.b16 %v911, %v910
    %v935 = vpack.c.b16 %v913, %v912
    %v936 = vpack.c.b16 %v915, %v914
    %v937 = vpack.c.b16 %v917, %v916
    %v938 = vpack.c.b16 %v919, %v918
    %v939 = vpack.c.b16 %v921, %v920
    %v940 = vpack.c.b16 %v923, %v922
    %v941 = vpack.c.b16 %v925, %v924
    %958 = vmatprep.subr.bf16.mxu0 0
    %959 = vmatpush1.bf16.msra.mxu0 %v933
    %960 = vmatprep.subr.bf16.mxu0 0
    %961 = vmatpush1.bf16.msra.mxu0 %v932
    %962 = vmatprep.subr.bf16.mxu0 0
    %963 = vmatpush1.bf16.msra.mxu0 %v931
    %964 = vmatprep.subr.bf16.mxu0 0
    %965 = vmatpush1.bf16.msra.mxu0 %v930
    %966 = vmatprep.subr.bf16.mxu0 0
    %967 = vmatpush1.bf16.msra.mxu0 %v929
    %968 = vmatprep.subr.bf16.mxu0 0
    %969 = vmatpush1.bf16.msra.mxu0 %v928
    %970 = vmatprep.subr.bf16.mxu0 0
    %971 = vmatpush1.bf16.msra.mxu0 %v927
    %972 = vmatprep.subr.bf16.mxu0 0
    %973 = vmatpush1.bf16.msra.mxu0 %v926
    %974 = vmatprep.subr.bf16.mxu0 0
    %975 = vmatpush2.bf16.msra.mxu0 %v941
    %976 = vmatprep.subr.bf16.mxu0 0
    %977 = vmatpush2.bf16.msra.mxu0 %v940
    %978 = vmatprep.subr.bf16.mxu0 0
    %979 = vmatpush2.bf16.msra.mxu0 %v939
    %980 = vmatprep.subr.bf16.mxu0 0
    %981 = vmatpush2.bf16.msra.mxu0 %v938
    %982 = vmatprep.subr.bf16.mxu0 0
    %983 = vmatpush2.bf16.msra.mxu0 %v937
    %984 = vmatprep.subr.bf16.mxu0 0
    %985 = vmatpush2.bf16.msra.mxu0 %v936
    %986 = vmatprep.subr.bf16.mxu0 0
    %987 = vmatpush2.bf16.msra.mxu0 %v935
    %988 = vmatprep.subr.bf16.mxu0 0
    %989 = vmatpush2.bf16.msra.mxu0 %v934
    %990 = vmatprep.mubr.bf16.mxu0 %v861
    %991 = vmatmul.mubr.bf16.gmra.mxu0 %v860
    %v992 = vpop.f32.mrf.mxu0
    %v993 = vadd.f32 %v857, %v992
    %v994 = vpop.f32.mrf.mxu0
    %v995 = vpop.f32.mrf.mxu0
    %v996 = vadd.f32 %v857, %v995
    %v997 = vpop.f32.mrf.mxu0
    %998 = vdwg.mxu0
    %v999 = vmax.f32 %v993, 0.0
    %v1000 = vmax.f32 %v996, 0.0
    %v1001 = vld [vmem:[#allocation9 + $0x10] sm:$0xff]
    %v1002 = vld [vmem:[#allocation9 + $0x30] sm:$0xff]
    %v1003 = vld [vmem:[#allocation9 + $0x50] sm:$0xff]
    %v1004 = vld [vmem:[#allocation9 + $0x70] sm:$0xff]
    %v1005 = vld [vmem:[#allocation9 + $0x90] sm:$0xff]
    %v1006 = vld [vmem:[#allocation9 + $0xb0] sm:$0xff]
    %v1007 = vld [vmem:[#allocation9 + $0xd0] sm:$0xff]
    %v1008 = vld [vmem:[#allocation9 + $0xf0] sm:$0xff]
    %v1009 = vpack.c.bf16 %v1000, %v999
    %v1011 = vlaneseq
    %v1012 = vshrl.u32 %v1011, 7
    %v1013 = vsub.s32 0, %v1012
    %v1014 = vrot.slane %v859, %v1013
    %v1015 = vlaneseq
    %v1016 = vshrl.u32 %v1015, 7
    %v1017 = vsub.s32 1, %v1016
    %v1018 = vrot.slane %v859, %v1017
    %v1029 = vunpack.c.l.b16 %v1001
    %v1030 = vunpack.c.h.b16 %v1001
    %v1031 = vunpack.c.l.b16 %v1002
    %v1032 = vunpack.c.h.b16 %v1002
    %v1033 = vunpack.c.l.b16 %v1003
    %v1034 = vunpack.c.h.b16 %v1003
    %v1035 = vunpack.c.l.b16 %v1004
    %v1036 = vunpack.c.h.b16 %v1004
    %v1037 = vunpack.c.l.b16 %v1005
    %v1038 = vunpack.c.h.b16 %v1005
    %v1039 = vunpack.c.l.b16 %v1006
    %v1040 = vunpack.c.h.b16 %v1006
    %v1041 = vunpack.c.l.b16 %v1007
    %v1042 = vunpack.c.h.b16 %v1007
    %v1043 = vunpack.c.l.b16 %v1008
    %v1044 = vunpack.c.h.b16 %v1008
    %v1045 = vpack.c.b16 %v1031, %v1029
    %v1046 = vpack.c.b16 %v1032, %v1030
    %v1047 = vpack.c.b16 %v1035, %v1033
    %v1048 = vpack.c.b16 %v1036, %v1034
    %v1049 = vpack.c.b16 %v1039, %v1037
    %v1050 = vpack.c.b16 %v1040, %v1038
    %v1051 = vpack.c.b16 %v1043, %v1041
    %v1052 = vpack.c.b16 %v1044, %v1042
    %v1062 = vsel %vm371, %v1009, 0
    %1064 = vmatprep.subr.bf16.mxu0 0
    %1065 = vmatpush1.bf16.msra.mxu0 0
    %1066 = vmatprep.subr.bf16.mxu0 0
    %1067 = vmatpush1.bf16.msra.mxu0 0
    %1068 = vmatprep.subr.bf16.mxu0 0
    %1069 = vmatpush1.bf16.msra.mxu0 0
    %1070 = vmatprep.subr.bf16.mxu0 0
    %1071 = vmatpush1.bf16.msra.mxu0 0
    %1072 = vmatprep.subr.bf16.mxu0 %v1052
    %1073 = vmatpush1.bf16.msra.mxu0 %v1051
    %1074 = vmatprep.subr.bf16.mxu0 %v1050
    %1075 = vmatpush1.bf16.msra.mxu0 %v1049
    %1076 = vmatprep.subr.bf16.mxu0 %v1048
    %1077 = vmatpush1.bf16.msra.mxu0 %v1047
    %1078 = vmatprep.subr.bf16.mxu0 %v1046
    %1079 = vmatpush1.bf16.msra.mxu0 %v1045
    %1080 = vmatprep.subr.bf16.mxu0 0
    %1081 = vmatpush2.bf16.msra.mxu0 0
    %1082 = vmatprep.subr.bf16.mxu0 0
    %1083 = vmatpush2.bf16.msra.mxu0 0
    %1084 = vmatprep.subr.bf16.mxu0 0
    %1085 = vmatpush2.bf16.msra.mxu0 0
    %1086 = vmatprep.subr.bf16.mxu0 0
    %1087 = vmatpush2.bf16.msra.mxu0 0
    %1088 = vmatprep.subr.bf16.mxu0 0
    %1089 = vmatpush2.bf16.msra.mxu0 0
    %1090 = vmatprep.subr.bf16.mxu0 0
    %1091 = vmatpush2.bf16.msra.mxu0 0
    %1092 = vmatprep.subr.bf16.mxu0 0
    %1093 = vmatpush2.bf16.msra.mxu0 0
    %1094 = vmatprep.subr.bf16.mxu0 0
    %1095 = vmatpush2.bf16.msra.mxu0 0
    %1096 = vmatprep.mubr.bf16.mxu0 0
    %1097 = vmatmul.mubr.bf16.gmra.mxu0 %v1062
    %v1098 = vpop.f32.mrf.mxu0
    %v1099 = vadd.f32 %v1014, %v1098
    %v1100 = vpop.f32.mrf.mxu0
    %v1101 = vadd.f32 %v1018, %v1100
    %v1102 = vpop.f32.mrf.mxu0
    %v1103 = vadd.f32 %v1014, %v1102
    %v1104 = vpop.f32.mrf.mxu0
    %v1105 = vadd.f32 %v1018, %v1104
    %1106 = vdwg.mxu0
    %v1107 = vld [vmem:[#allocation4 + $0x14] ss:$0 sm:$0xff]
    %v1108 = vld [vmem:[#allocation4 + $0x1c] ss:$0 sm:$0xff]
    %v1109 = vld [vmem:[#allocation4 + $0x17] ss:$0 sm:$0xff]
    %v1110 = vmul.f32 %v1099, %v1107
    %v1111 = vmul.f32 %v1103, %v1107
    %1112 = vadd.xlane.f32.xlu0 %v1110
    %v1113 = vpop.xlane.xlu0 %1112
    %1114 = vadd.xlane.f32.xlu0 %v1111
    %v1115 = vpop.xlane.xlu0 %1114
    %v1116 = vmul.f32 %v1101, %v1108
    %v1117 = vmul.f32 %v1105, %v1108
    %1118 = vadd.xlane.f32.xlu0 %v1116
    %v1119 = vpop.xlane.xlu0 %1118
    %1120 = vadd.xlane.f32.xlu0 %v1117
    %v1121 = vpop.xlane.xlu0 %1120
    %v1122 = vadd.f32 %v1113, %v1119
    %v1123 = vadd.f32 %v1115, %v1121
    %v1124 = vadd.f32 %v1122, %v1109
    %v1125 = vadd.f32 %v1123, %v1109
    %v1126 = vxor.u32 %v1124, 2147483648
    %v1127 = vxor.u32 %v1125, 2147483648
    %v1128 = vmul.f32 %v1126, 1.442695
    %v1129 = vpow.pop %v1128
    %v1130 = vmul.f32 %v1127, 1.442695
    %v1131 = vpow.pop %v1130
    %v1132 = vadd.f32 %v1129, 1.0
    %v1133 = vadd.f32 %v1131, 1.0
    %v1134 = vrcp.pop %v1132
    %v1135 = vmul.f32 1.0, %v1134
    %v1136 = vrcp.pop %v1133
    %v1137 = vmul.f32 1.0, %v1136
    %v1138 = vmax.f32 %v1135, 0.15
    %v1139 = vmax.f32 %v1137, 0.15
    %v1140 = vmin.f32 %v1138, 0.85
    %v1141 = vmin.f32 %v1139, 0.85
    %v1142 = vld [vmem:[#allocation4 + $0x15] ss:$0 sm:$0xff]
    %v1143 = vld [vmem:[#allocation4 + $0x1d] ss:$0 sm:$0xff]
    %v1144 = vmul.f32 %v1099, %v1140
    %v1145 = vmul.f32 %v1103, %v1141
    %v1146 = vsub.f32 1.0, %v1140
    %v1147 = vsub.f32 1.0, %v1141
    %v1148 = vmul.f32 %v1146, %v1101
    %v1149 = vmul.f32 %v1147, %v1105
    %v1150 = vadd.f32 %v1144, %v1148
    %v1151 = vadd.f32 %v1145, %v1149
    %1152 = vadd.xlane.f32.xlu0 %v1150
    %v1153 = vpop.xlane.xlu0 %1152
    %1154 = vadd.xlane.f32.xlu0 %v1151
    %v1155 = vpop.xlane.xlu0 %1154
    %v1156 = vmul.f32 %v1153, %v100
    %v1157 = vmul.f32 %v1155, %v100
    %v1158 = vsub.f32 %v1150, %v1156
    %v1159 = vsub.f32 %v1151, %v1157
    %v1160 = vmul.f32 %v1158, %v1158
    %v1161 = vmul.f32 %v1159, %v1159
    %1162 = vadd.xlane.f32.xlu0 %v1160
    %v1163 = vpop.xlane.xlu0 %1162
    %1164 = vadd.xlane.f32.xlu0 %v1161
    %v1165 = vpop.xlane.xlu0 %1164
    %v1166 = vmul.f32 %v1163, %v100
    %v1167 = vmul.f32 %v1165, %v100
    %v1168 = vadd.f32 %v1166, 1e-05
    %v1169 = vadd.f32 %v1167, 1e-05
    %v1170 = vrsqrt.pop %v1168
    %v1171 = vrsqrt.pop %v1169
    %v1172 = vmul.f32 %v1158, %v1170
    %v1173 = vmul.f32 %v1159, %v1171
    %v1174 = vmul.f32 %v1172, %v1142
    %v1175 = vmul.f32 %v1173, %v1142
    %v1176 = vadd.f32 %v1174, %v1143
    %v1177 = vadd.f32 %v1175, %v1143
    %1178 = vadd.xlane.f32.xlu0 %v1176
    %v1179 = vpop.xlane.xlu0 %1178
    %1180 = vadd.xlane.f32.xlu0 %v1177
    %v1181 = vpop.xlane.xlu0 %1180
    %v1182 = vmul.f32 %v1179, %v100
    %v1183 = vmul.f32 %v1181, %v100
    %v1184 = vsub.f32 %v1176, %v1182
    %v1185 = vsub.f32 %v1177, %v1183
    %v1186 = vmul.f32 %v1184, %v1184
    %v1187 = vmul.f32 %v1185, %v1185
    %1188 = vadd.xlane.f32.xlu0 %v1186
    %v1189 = vpop.xlane.xlu0 %1188
    %1190 = vadd.xlane.f32.xlu0 %v1187
    %v1191 = vpop.xlane.xlu0 %1190
    %v1192 = vmul.f32 %v1189, %v100
    %v1193 = vmul.f32 %v1191, %v100
    %v1194 = vadd.f32 %v1192, 1e-05
    %v1195 = vadd.f32 %v1193, 1e-05
    %v1196 = vrsqrt.pop %v1194
    %v1197 = vrsqrt.pop %v1195
    %v1198 = vmul.f32 %v1184, %v1196
    %v1199 = vmul.f32 %v1185, %v1197
    %v1200 = vld [vmem:[#allocation6 + $0x4] sm:$0xf]
    %v1201 = vld [vmem:[#allocation6 + $0x10] sm:$0xf]
    %v1202 = vld [vmem:[#allocation6 + $0x1c] sm:$0xf]
    %v1203 = vld [vmem:[#allocation6 + $0x28] sm:$0xf]
    %v1204 = vld [vmem:[#allocation6 + $0x34] sm:$0xf]
    %v1205 = vld [vmem:[#allocation6 + $0x40] sm:$0xf]
    %v1206 = vld [vmem:[#allocation6 + $0x4c] sm:$0xf]
    %v1207 = vld [vmem:[#allocation6 + $0x58] sm:$0xf]
    %v1208 = vld [vmem:[#allocation6 + $0x64] sm:$0xf]
    %v1209 = vld [vmem:[#allocation6 + $0x70] sm:$0xf]
    %v1210 = vld [vmem:[#allocation6 + $0x7c] sm:$0xf]
    %v1211 = vld [vmem:[#allocation6 + $0x88] sm:$0xf]
    %v1212 = vld [vmem:[#allocation6 + $0x94] sm:$0xf]
    %v1213 = vld [vmem:[#allocation6 + $0xa0] sm:$0xf]
    %v1214 = vld [vmem:[#allocation6 + $0xac] sm:$0xf]
    %v1215 = vld [vmem:[#allocation6 + $0xb8] sm:$0xf]
    %v1216 = vld [vmem:[#allocation4 + $0x6] ss:$0 sm:$0xff]
    %s1217 = scalar_lea.vmem [#allocation4], 7
    %v1218 = vld [vmem:[%s1217] ss:$8 sm:$0x3]
    %v1219 = vpack.c.bf16 %v1199, %v1198
    %v1236 = vunpack.c.l.b16 %v1200
    %v1237 = vunpack.c.l.b16 %v1201
    %v1238 = vunpack.c.l.b16 %v1202
    %v1239 = vunpack.c.l.b16 %v1203
    %v1240 = vunpack.c.l.b16 %v1204
    %v1241 = vunpack.c.l.b16 %v1205
    %v1242 = vunpack.c.l.b16 %v1206
    %v1243 = vunpack.c.l.b16 %v1207
    %v1244 = vunpack.c.l.b16 %v1208
    %v1245 = vunpack.c.l.b16 %v1209
    %v1246 = vunpack.c.l.b16 %v1210
    %v1247 = vunpack.c.l.b16 %v1211
    %v1248 = vunpack.c.l.b16 %v1212
    %v1249 = vunpack.c.l.b16 %v1213
    %v1250 = vunpack.c.l.b16 %v1214
    %v1251 = vunpack.c.l.b16 %v1215
    %v1252 = vpack.c.b16 %v1237, %v1236
    %v1253 = vpack.c.b16 %v1239, %v1238
    %v1254 = vpack.c.b16 %v1241, %v1240
    %v1255 = vpack.c.b16 %v1243, %v1242
    %v1256 = vpack.c.b16 %v1245, %v1244
    %v1257 = vpack.c.b16 %v1247, %v1246
    %v1258 = vpack.c.b16 %v1249, %v1248
    %v1259 = vpack.c.b16 %v1251, %v1250
    %1268 = vmatprep.subr.bf16.mxu0 0
    %1269 = vmatpush1.bf16.msra.mxu0 %v1259
    %1270 = vmatprep.subr.bf16.mxu0 0
    %1271 = vmatpush1.bf16.msra.mxu0 %v1258
    %1272 = vmatprep.subr.bf16.mxu0 0
    %1273 = vmatpush1.bf16.msra.mxu0 %v1257
    %1274 = vmatprep.subr.bf16.mxu0 0
    %1275 = vmatpush1.bf16.msra.mxu0 %v1256
    %1276 = vmatprep.subr.bf16.mxu0 0
    %1277 = vmatpush1.bf16.msra.mxu0 %v1255
    %1278 = vmatprep.subr.bf16.mxu0 0
    %1279 = vmatpush1.bf16.msra.mxu0 %v1254
    %1280 = vmatprep.subr.bf16.mxu0 0
    %1281 = vmatpush1.bf16.msra.mxu0 %v1253
    %1282 = vmatprep.subr.bf16.mxu0 0
    %1283 = vmatpush1.bf16.msra.mxu0 %v1252
    %1284 = vmatprep.subr.bf16.mxu0 0
    %1285 = vmatpush2.bf16.msra.mxu0 0
    %1286 = vmatprep.subr.bf16.mxu0 0
    %1287 = vmatpush2.bf16.msra.mxu0 0
    %1288 = vmatprep.subr.bf16.mxu0 0
    %1289 = vmatpush2.bf16.msra.mxu0 0
    %1290 = vmatprep.subr.bf16.mxu0 0
    %1291 = vmatpush2.bf16.msra.mxu0 0
    %1292 = vmatprep.subr.bf16.mxu0 0
    %1293 = vmatpush2.bf16.msra.mxu0 0
    %1294 = vmatprep.subr.bf16.mxu0 0
    %1295 = vmatpush2.bf16.msra.mxu0 0
    %1296 = vmatprep.subr.bf16.mxu0 0
    %1297 = vmatpush2.bf16.msra.mxu0 0
    %1298 = vmatprep.subr.bf16.mxu0 0
    %1299 = vmatpush2.bf16.msra.mxu0 0
    %1300 = vmatprep.mubr.bf16.mxu0 0
    %1301 = vmatmul.mubr.bf16.gmra.mxu0 %v1219
    %v1302 = vpop.f32.mrf.mxu0
    %v1303 = vadd.f32 %v1216, %v1302
    %v1304 = vpop.f32.mrf.mxu0
    %v1305 = vpop.f32.mrf.mxu0
    %v1306 = vadd.f32 %v1216, %v1305
    %v1307 = vpop.f32.mrf.mxu0
    %1308 = vdwg.mxu0
    %v1309 = vmax.f32 %v1303, 0.0
    %v1310 = vmax.f32 %v1306, 0.0
    %v1311 = vld [vmem:[#allocation9 + $0x18] sm:$0xff]
    %v1312 = vld [vmem:[#allocation9 + $0x38] sm:$0xff]
    %v1313 = vld [vmem:[#allocation9 + $0x58] sm:$0xff]
    %v1314 = vld [vmem:[#allocation9 + $0x78] sm:$0xff]
    %v1315 = vld [vmem:[#allocation9 + $0x98] sm:$0xff]
    %v1316 = vld [vmem:[#allocation9 + $0xb8] sm:$0xff]
    %v1317 = vld [vmem:[#allocation9 + $0xd8] sm:$0xff]
    %v1318 = vld [vmem:[#allocation9 + $0xf8] sm:$0xff]
    %v1319 = vpack.c.bf16 %v1310, %v1309
    %v1321 = vlaneseq
    %v1322 = vshrl.u32 %v1321, 7
    %v1323 = vsub.s32 0, %v1322
    %v1324 = vrot.slane %v1218, %v1323
    %v1325 = vlaneseq
    %v1326 = vshrl.u32 %v1325, 7
    %v1327 = vsub.s32 1, %v1326
    %v1328 = vrot.slane %v1218, %v1327
    %v1339 = vunpack.c.l.b16 %v1311
    %v1340 = vunpack.c.h.b16 %v1311
    %v1341 = vunpack.c.l.b16 %v1312
    %v1342 = vunpack.c.h.b16 %v1312
    %v1343 = vunpack.c.l.b16 %v1313
    %v1344 = vunpack.c.h.b16 %v1313
    %v1345 = vunpack.c.l.b16 %v1314
    %v1346 = vunpack.c.h.b16 %v1314
    %v1347 = vunpack.c.l.b16 %v1315
    %v1348 = vunpack.c.h.b16 %v1315
    %v1349 = vunpack.c.l.b16 %v1316
    %v1350 = vunpack.c.h.b16 %v1316
    %v1351 = vunpack.c.l.b16 %v1317
    %v1352 = vunpack.c.h.b16 %v1317
    %v1353 = vunpack.c.l.b16 %v1318
    %v1354 = vunpack.c.h.b16 %v1318
    %v1355 = vpack.c.b16 %v1341, %v1339
    %v1356 = vpack.c.b16 %v1342, %v1340
    %v1357 = vpack.c.b16 %v1345, %v1343
    %v1358 = vpack.c.b16 %v1346, %v1344
    %v1359 = vpack.c.b16 %v1349, %v1347
    %v1360 = vpack.c.b16 %v1350, %v1348
    %v1361 = vpack.c.b16 %v1353, %v1351
    %v1362 = vpack.c.b16 %v1354, %v1352
    %v1372 = vsel %vm371, %v1319, 0
    %1374 = vmatprep.subr.bf16.mxu0 0
    %1375 = vmatpush1.bf16.msra.mxu0 0
    %1376 = vmatprep.subr.bf16.mxu0 0
    %1377 = vmatpush1.bf16.msra.mxu0 0
    %1378 = vmatprep.subr.bf16.mxu0 0
    %1379 = vmatpush1.bf16.msra.mxu0 0
    %1380 = vmatprep.subr.bf16.mxu0 0
    %1381 = vmatpush1.bf16.msra.mxu0 0
    %1382 = vmatprep.subr.bf16.mxu0 %v1362
    %1383 = vmatpush1.bf16.msra.mxu0 %v1361
    %1384 = vmatprep.subr.bf16.mxu0 %v1360
    %1385 = vmatpush1.bf16.msra.mxu0 %v1359
    %1386 = vmatprep.subr.bf16.mxu0 %v1358
    %1387 = vmatpush1.bf16.msra.mxu0 %v1357
    %1388 = vmatprep.subr.bf16.mxu0 %v1356
    %1389 = vmatpush1.bf16.msra.mxu0 %v1355
    %1390 = vmatprep.subr.bf16.mxu0 0
    %1391 = vmatpush2.bf16.msra.mxu0 0
    %1392 = vmatprep.subr.bf16.mxu0 0
    %1393 = vmatpush2.bf16.msra.mxu0 0
    %1394 = vmatprep.subr.bf16.mxu0 0
    %1395 = vmatpush2.bf16.msra.mxu0 0
    %1396 = vmatprep.subr.bf16.mxu0 0
    %1397 = vmatpush2.bf16.msra.mxu0 0
    %1398 = vmatprep.subr.bf16.mxu0 0
    %1399 = vmatpush2.bf16.msra.mxu0 0
    %1400 = vmatprep.subr.bf16.mxu0 0
    %1401 = vmatpush2.bf16.msra.mxu0 0
    %1402 = vmatprep.subr.bf16.mxu0 0
    %1403 = vmatpush2.bf16.msra.mxu0 0
    %1404 = vmatprep.subr.bf16.mxu0 0
    %1405 = vmatpush2.bf16.msra.mxu0 0
    %1406 = vmatprep.mubr.bf16.mxu0 0
    %1407 = vmatmul.mubr.bf16.gmra.mxu0 %v1372
    %v1408 = vpop.f32.mrf.mxu0
    %v1409 = vadd.f32 %v1324, %v1408
    %v1410 = vpop.f32.mrf.mxu0
    %v1411 = vadd.f32 %v1328, %v1410
    %v1412 = vpop.f32.mrf.mxu0
    %v1413 = vadd.f32 %v1324, %v1412
    %v1414 = vpop.f32.mrf.mxu0
    %v1415 = vadd.f32 %v1328, %v1414
    %1416 = vdwg.mxu0
    %1417 = vst [vmem:[%s7] sm:$0xff] %v1409
    %1418 = vst [vmem:[%s7 + $0x8] sm:$0xff] %v1411
    %1419 = vst [vmem:[%s7 + $0x10] sm:$0xff] %v1413
    %1420 = vst [vmem:[%s7 + $0x18] sm:$0xff] %v1415
    %v1421 = vrot.slane %v1176, 4
    %v1422 = vadd.f32 %v1176, %v1421
    %v1423 = vrot.slane %v1422, 2
    %v1424 = vadd.f32 %v1422, %v1423
    %v1425 = vrot.slane %v1424, 1
    %v1426 = vadd.f32 %v1424, %v1425
    %v1427 = vrcp.pop 8.0
    %v1428 = vmul.f32 %v1426, %v1427
    %v1429 = vrot.slane %v1177, 4
    %v1430 = vadd.f32 %v1177, %v1429
    %v1431 = vrot.slane %v1430, 2
    %v1432 = vadd.f32 %v1430, %v1431
    %v1433 = vrot.slane %v1432, 1
    %v1434 = vadd.f32 %v1432, %v1433
    %v1435 = vmul.f32 %v1434, %v1427
    %vm1436 = vcmask 1040384
    %v1437 = vsel %vm1436, %v1428, %v1435
    %v1438 = vld [vmem:[#allocation6 + $0x8] sm:$0xf]
    %v1439 = vld [vmem:[#allocation6 + $0x14] sm:$0xf]
    %v1440 = vld [vmem:[#allocation6 + $0x20] sm:$0xf]
    %v1441 = vld [vmem:[#allocation6 + $0x2c] sm:$0xf]
    %v1442 = vld [vmem:[#allocation6 + $0x38] sm:$0xf]
    %v1443 = vld [vmem:[#allocation6 + $0x44] sm:$0xf]
    %v1444 = vld [vmem:[#allocation6 + $0x50] sm:$0xf]
    %v1445 = vld [vmem:[#allocation6 + $0x5c] sm:$0xf]
    %v1446 = vld [vmem:[#allocation6 + $0x68] sm:$0xf]
    %v1447 = vld [vmem:[#allocation6 + $0x74] sm:$0xf]
    %v1448 = vld [vmem:[#allocation6 + $0x80] sm:$0xf]
    %v1449 = vld [vmem:[#allocation6 + $0x8c] sm:$0xf]
    %v1450 = vld [vmem:[#allocation6 + $0x98] sm:$0xf]
    %v1451 = vld [vmem:[#allocation6 + $0xa4] sm:$0xf]
    %v1452 = vld [vmem:[#allocation6 + $0xb0] sm:$0xf]
    %v1453 = vld [vmem:[#allocation6 + $0xbc] sm:$0xf]
    %v1454 = vld [vmem:[#allocation4 + $0x1f] ss:$0 sm:$0xff]
    %v1455 = vpack.c.bf16 %v1437, %v1437
    %v1472 = vunpack.c.l.b16 %v1438
    %v1473 = vunpack.c.l.b16 %v1439
    %v1474 = vunpack.c.l.b16 %v1440
    %v1475 = vunpack.c.l.b16 %v1441
    %v1476 = vunpack.c.l.b16 %v1442
    %v1477 = vunpack.c.l.b16 %v1443
    %v1478 = vunpack.c.l.b16 %v1444
    %v1479 = vunpack.c.l.b16 %v1445
    %v1480 = vunpack.c.l.b16 %v1446
    %v1481 = vunpack.c.l.b16 %v1447
    %v1482 = vunpack.c.l.b16 %v1448
    %v1483 = vunpack.c.l.b16 %v1449
    %v1484 = vunpack.c.l.b16 %v1450
    %v1485 = vunpack.c.l.b16 %v1451
    %v1486 = vunpack.c.l.b16 %v1452
    %v1487 = vunpack.c.l.b16 %v1453
    %v1488 = vpack.c.b16 %v1473, %v1472
    %v1489 = vpack.c.b16 %v1475, %v1474
    %v1490 = vpack.c.b16 %v1477, %v1476
    %v1491 = vpack.c.b16 %v1479, %v1478
    %v1492 = vpack.c.b16 %v1481, %v1480
    %v1493 = vpack.c.b16 %v1483, %v1482
    %v1494 = vpack.c.b16 %v1485, %v1484
    %v1495 = vpack.c.b16 %v1487, %v1486
    %1504 = vmatprep.subr.bf16.mxu0 0
    %1505 = vmatpush1.bf16.msra.mxu0 %v1495
    %1506 = vmatprep.subr.bf16.mxu0 0
    %1507 = vmatpush1.bf16.msra.mxu0 %v1494
    %1508 = vmatprep.subr.bf16.mxu0 0
    %1509 = vmatpush1.bf16.msra.mxu0 %v1493
    %1510 = vmatprep.subr.bf16.mxu0 0
    %1511 = vmatpush1.bf16.msra.mxu0 %v1492
    %1512 = vmatprep.subr.bf16.mxu0 0
    %1513 = vmatpush1.bf16.msra.mxu0 %v1491
    %1514 = vmatprep.subr.bf16.mxu0 0
    %1515 = vmatpush1.bf16.msra.mxu0 %v1490
    %1516 = vmatprep.subr.bf16.mxu0 0
    %1517 = vmatpush1.bf16.msra.mxu0 %v1489
    %1518 = vmatprep.subr.bf16.mxu0 0
    %1519 = vmatpush1.bf16.msra.mxu0 %v1488
    %1520 = vmatprep.subr.bf16.mxu0 0
    %1521 = vmatpush2.bf16.msra.mxu0 0
    %1522 = vmatprep.subr.bf16.mxu0 0
    %1523 = vmatpush2.bf16.msra.mxu0 0
    %1524 = vmatprep.subr.bf16.mxu0 0
    %1525 = vmatpush2.bf16.msra.mxu0 0
    %1526 = vmatprep.subr.bf16.mxu0 0
    %1527 = vmatpush2.bf16.msra.mxu0 0
    %1528 = vmatprep.subr.bf16.mxu0 0
    %1529 = vmatpush2.bf16.msra.mxu0 0
    %1530 = vmatprep.subr.bf16.mxu0 0
    %1531 = vmatpush2.bf16.msra.mxu0 0
    %1532 = vmatprep.subr.bf16.mxu0 0
    %1533 = vmatpush2.bf16.msra.mxu0 0
    %1534 = vmatprep.subr.bf16.mxu0 0
    %1535 = vmatpush2.bf16.msra.mxu0 0
    %1536 = vmatprep.mubr.bf16.mxu0 0
    %1537 = vmatmul.mubr.bf16.gmra.mxu0 %v1455
    %v1538 = vpop.f32.mrf.mxu0
    %v1539 = vadd.f32 %v1454, %v1538
    %v1540 = vpop.f32.mrf.mxu0
    %v1541 = vpop.f32.mrf.mxu0
    %v1542 = vpop.f32.mrf.mxu0
    %1543 = vdwg.mxu0
    %v1546 = vcombine.low %v1539, %v1437
    %v1548 = vunpack.c.l.s4 1983009808
    %v1549 = vunpack.c.0.s8 %v1548
    %v1550 = vlaneseq
    %v1551 = vshrl.u32 %v1550, 7
    %v1552 = vsub.s32 %v1549, %v1551
    %v1553 = vrot.slane %v1546, %v1552
    %1555 = vst [vmem:[%s8] sm:$0xf] %v1553
    // Predicated region
    $region50: #{pmpl_forward.1} parent=1 // pred_check
      _
    $region51: #{pmpl_forward.1} parent=1 // pred_check_branch
      %1557 = sbr.rel (0) target = $region53
    $region52: #{pmpl_forward.1} parent=1 // pred_region
      _
    $region53: #{pmpl_forward.1} parent=1 // pred_fallthru
      _
    // Predicated region
    $region54: #{pmpl_forward.1} parent=1 // pred_check
      _
    $region55: #{pmpl_forward.1} parent=1 // pred_check_branch
      %1559 = sbr.rel (0) target = $region57
    $region56: #{pmpl_forward.1} parent=1 // pred_region
      _
    $region57: #{pmpl_forward.1} parent=1 // pred_fallthru
      _
    // Predicated region
    $region58: #{pmpl_forward.1} parent=1 // pred_check
      _
    $region59: #{pmpl_forward.1} parent=1 // pred_check_branch
      %1561 = sbr.rel (0) target = $region61
    $region60: #{pmpl_forward.1} parent=1 // pred_region
      _
    $region61: #{pmpl_forward.1} parent=1 // pred_fallthru
      _
    // Predicated region
    $region62: #{pmpl_forward.1} parent=1 // pred_check
      _
    $region63: #{pmpl_forward.1} parent=1 // pred_check_branch
      %1563 = sbr.rel (0) target = $region65
    $region64: #{pmpl_forward.1} parent=1 // pred_region
      _
    $region65: #{pmpl_forward.1} parent=1 // pred_fallthru
      _
    %1564 = vsyncpa [#allocation3], 1
    %1565 = vsyncpa [#allocation5], 1
    %1566 = vsyncpa [#allocation8], 1

</llo_original>
